<compile_context>
chip_gen: v5e
topology: v5e:2x2
jax: 0.10.0
libtpu: 0.0.40
codegen_flags: <defaults>
</compile_context>

<pallas_src>
import functools
import math

import numpy as np
import jax
import jax.numpy as jnp
from jax import lax
from jax.experimental import pallas as pl
from jax.experimental.pallas import tpu as pltpu


_LANE = 128                       # output channels padded to lane width (dense stores)
_BN_EPS = 1e-5
_VMEM_BUDGET = 12 * 1024 * 1024   # per-grid-step working-set budget (safe on v5e/v7x)


def _round_up(x, m):
    return (x + m - 1) // m * m


def _choose_row_tile(rows, unit, bytes_per_row, target=2048):
    """Row tile: multiple of `unit`, ~target rows, within the VMEM budget."""
    max_rows_budget = max(unit, _VMEM_BUDGET // max(1, bytes_per_row))
    cap = max(unit, min(target, max_rows_budget))
    row_tile = (cap // unit) * unit
    rows_u = _round_up(rows, unit)
    if row_tile > rows_u:          # no point tiling past the (unit-rounded) problem
        row_tile = rows_u
    return row_tile


def _choose_sub(row_tile, unit, target=256):
    """Largest divisor of row_tile that is a multiple of unit and <= max(unit, target)."""
    best = unit
    cap = max(unit, target)
    d = unit
    while d <= row_tile:
        if row_tile % d == 0 and d <= cap:
            best = d
        d += unit
    return best


# --------------------------------------------------------------------------- #
# Pass 1: conv per sub-chunk (MXU) -> per-tile BN partial statistics only      #
# --------------------------------------------------------------------------- #
def _make_conv_stats_kernel(sub, n_sub, c128):
    def kernel(p_ref, w_ref, stats_ref):
        w = w_ref[...]

        def body(c, carry):
            s, ss = carry
            r0 = pl.multiple_of(c * sub, sub)
            acc = jnp.dot(p_ref[pl.ds(r0, sub), :], w,
                          preferred_element_type=jnp.float32)   # (sub, c128) f32
            s = s + jnp.sum(acc, axis=0, keepdims=True)
            ss = ss + jnp.sum(acc * acc, axis=0, keepdims=True)
            return s, ss

        zero = jnp.zeros((1, c128), jnp.float32)
        s, ss = lax.fori_loop(0, n_sub, body, (zero, zero), unroll=True)
        stats_ref[0, 0:1, :] = s
        stats_ref[0, 1:2, :] = ss
    return kernel


# --------------------------------------------------------------------------- #
# Pass 2: recompute conv -> folded BN -> ReLU -> optional in-kernel 2x2 pool   #
# --------------------------------------------------------------------------- #
def _make_bn_relu_kernel(sub, n_sub, c128):
    def kernel(p_ref, w_ref, scale_ref, shift_ref, o_ref):
        w = w_ref[...]
        scale = scale_ref[...]
        shift = shift_ref[...]

        def body(c, carry):
            r0 = pl.multiple_of(c * sub, sub)
            acc = jnp.dot(p_ref[pl.ds(r0, sub), :], w,
                          preferred_element_type=jnp.float32)
            o_ref[pl.ds(r0, sub), :] = jnp.maximum(acc * scale + shift, 0.0)
            return carry

        lax.fori_loop(0, n_sub, body, 0, unroll=True)
    return kernel


def _make_bn_relu_pool_kernel(sub, n_sub, W, c128):
    t = sub // (2 * W)             # number of 2-image-row pairs per sub-chunk
    sub_out = sub // 4

    def kernel(p_ref, w_ref, scale_ref, shift_ref, o_ref):
        w = w_ref[...]
        scale = scale_ref[...]
        shift = shift_ref[...]

        def body(c, carry):
            r0 = pl.multiple_of(c * sub, sub)
            acc = jnp.dot(p_ref[pl.ds(r0, sub), :], w,
                          preferred_element_type=jnp.float32)
            y = jnp.maximum(acc * scale + shift, 0.0)            # (sub, c128)
            # AvgPool2d(2,2) as reshapes + 3 VPU adds (no pooling matmul).
            y4 = y.reshape(t, 2, W, c128)                        # (pair, h-parity, w, c)
            yh = y4[:, 0, :, :] + y4[:, 1, :, :]                 # (t, W, c128)
            yw = yh.reshape(t, W // 2, 2, c128)                  # (pair, w2, w-parity, c)
            o = (yw[:, :, 0, :] + yw[:, :, 1, :]) * 0.25         # (t, W//2, c128)
            o0 = pl.multiple_of(c * sub_out, sub_out)
            o_ref[pl.ds(o0, sub_out), :] = o.reshape(sub_out, c128)
            return carry

        lax.fori_loop(0, n_sub, body, 0, unroll=True)
    return kernel


# --------------------------------------------------------------------------- #
# Public wrapper: PyTorch-style NCHW in / NCHW out                             #
# --------------------------------------------------------------------------- #
@functools.partial(jax.jit, static_argnames=("is_pool", "matmul_dtype"))
def conv_block(x_nchw, w_oihw, gamma, beta, *, is_pool=False,
               matmul_dtype=jnp.bfloat16):
    # matmul_dtype=bfloat16 (default) halves matmul-input DMA bytes and matches the
    # bf16-native MXU on v5e/v6e/v7x; accumulation stays in f32.
    N, Cin, H, W = x_nchw.shape
    Cout = w_oihw.shape[0]
    rows = N * H * W
    K = 9 * Cin                                  # NOT lane-padded (see review)
    C128 = _round_up(Cout, _LANE)

    # ---- im2col in the wrapper: 9 shifted taps, narrow K, matmul_dtype -------
    # TODO(synk): build the 9 taps inside the pass-1 kernel from an NHWC tile +
    #             2-row halo to avoid materializing the 9x im2col matrix at all.
    x = jnp.transpose(x_nchw, (0, 2, 3, 1)).astype(matmul_dtype)   # NHWC
    x_pad = jnp.pad(x, ((0, 0), (1, 1), (1, 1), (0, 0)))           # conv padding=1
    taps = [x_pad[:, dy:dy + H, dx:dx + W, :] for dy in range(3) for dx in range(3)]
    patches = jnp.concatenate(taps, axis=-1).reshape(rows, K)

    # ---- weights -> (9*Cin, Cout); pad only the output-channel lanes ---------
    w_mat = jnp.transpose(w_oihw, (2, 3, 1, 0)).reshape(K, Cout).astype(jnp.float32)
    w_mat = jnp.pad(w_mat, ((0, 0), (0, C128 - Cout))).astype(matmul_dtype)

    gamma_p = jnp.pad(gamma.astype(jnp.float32), (0, C128 - Cout))
    beta_p = jnp.pad(beta.astype(jnp.float32), (0, C128 - Cout))

    # ---- row tiling: multiples of `unit`, pad rows instead of one giant tile --
    if is_pool:
        assert H % 2 == 0 and W % 2 == 0, "AvgPool2d(2,2) path needs even H, W"
        unit = math.lcm(2 * W, 32)   # whole 2xW pairs AND pooled tile rows % 8 == 0
    else:
        unit = 8
    itemsize = jnp.dtype(matmul_dtype).itemsize
    # Double-buffered patches block + double-buffered f32 output block per row.
    bytes_per_row = 2 * K * itemsize + 2 * C128 * 4
    row_tile = _choose_row_tile(rows, unit, bytes_per_row, target=2048)
    rows_p = _round_up(rows, row_tile)
    n_tiles = rows_p // row_tile
    if rows_p != rows:
        # Zero rows -> conv output 0 -> contribute nothing to sums; sliced off later.
        patches = jnp.pad(patches, ((0, rows_p - rows), (0, 0)))

    sub = _choose_sub(row_tile, unit, target=256)
    n_sub = row_tile // sub

    # Independent row tiles: "parallel" shards this axis across v7x's two TCs.
    compiler_params = pltpu.CompilerParams(dimension_semantics=("parallel",))

    p_spec = pl.BlockSpec((row_tile, K), lambda i: (i, 0))
    w_spec = pl.BlockSpec((K, C128), lambda i: (0, 0))

    # ---- pass 1: conv per sub-chunk -> tiny per-tile BN partial stats ---------
    stats = pl.pallas_call(
        _make_conv_stats_kernel(sub, n_sub, C128),
        grid=(n_tiles,),
        in_specs=[p_spec, w_spec],
        out_specs=pl.BlockSpec((1, 2, C128), lambda i: (i, 0, 0)),
        out_shape=jax.ShapeDtypeStruct((n_tiles, 2, C128), jnp.float32),
        compiler_params=compiler_params,
    )(patches, w_mat)

    # ---- fold batch stats into a single per-channel scale/shift (tiny, in JAX) -
    count = jnp.float32(rows)                      # real rows only
    total = jnp.sum(stats[:, 0, :], axis=0)
    total_sq = jnp.sum(stats[:, 1, :], axis=0)
    mean = total / count
    # TODO(synk): E[x^2]-mean^2 can cancel when |mean| >> std; a centered second
    #             pass would be numerically sturdier for extreme inputs.
    var = jnp.maximum(total_sq / count - mean * mean, 0.0)
    scale = (gamma_p * lax.rsqrt(var + _BN_EPS)).reshape(1, C128)
    shift = (beta_p - mean.reshape(1, C128) * scale)

    # ---- pass 2: recompute conv -> BN (folded) -> ReLU (-> 2x2 avg pool) ------
    if is_pool:
        out_rows_p, out_tile = rows_p // 4, row_tile // 4
        kernel2 = _make_bn_relu_pool_kernel(sub, n_sub, W, C128)
    else:
        out_rows_p, out_tile = rows_p, row_tile
        kernel2 = _make_bn_relu_kernel(sub, n_sub, C128)

    out = pl.pallas_call(
        kernel2,
        grid=(n_tiles,),
        in_specs=[p_spec, w_spec,
                  pl.BlockSpec((1, C128), lambda i: (0, 0)),
                  pl.BlockSpec((1, C128), lambda i: (0, 0))],
        out_specs=pl.BlockSpec((out_tile, C128), lambda i: (i, 0)),
        out_shape=jax.ShapeDtypeStruct((out_rows_p, C128), jnp.float32),
        compiler_params=compiler_params,
    )(patches, w_mat, scale, shift)

    if is_pool:
        H2, W2, real_out = H // 2, W // 2, rows // 4
    else:
        H2, W2, real_out = H, W, rows
    out = out[:real_out, :Cout].reshape(N, H2, W2, Cout)
    return jnp.transpose(out, (0, 3, 1, 2))        # back to NCHW (module semantics)


# --------------------------------------------------------------------------- #
# Pure-JAX reference matching PyTorch ConvBlock.forward (training-mode BN)     #
# --------------------------------------------------------------------------- #
def reference(x, w, gamma, beta, is_pool):
    y = jax.lax.conv_general_dilated(
        x, w, window_strides=(1, 1), padding=((1, 1), (1, 1)),
        dimension_numbers=("NCHW", "OIHW", "NCHW"))
    mean = jnp.mean(y, axis=(0, 2, 3), keepdims=True)
    var = jnp.mean(jnp.square(y - mean), axis=(0, 2, 3), keepdims=True)
    y = (y - mean) * jax.lax.rsqrt(var + _BN_EPS)
    y = y * gamma.reshape(1, -1, 1, 1) + beta.reshape(1, -1, 1, 1)
    y = jnp.maximum(y, 0.0)
    if is_pool:
        N, C, H, W = y.shape
        y = y.reshape(N, C, H // 2, 2, W // 2, 2).mean(axis=(3, 5))
    return y


if __name__ == "__main__":
    # Small shapes consistent with the module: pan_in=4, pan_out=8, 16x16 images.
    N, Cin, H, W, Cout = 2, 4, 16, 16, 8

    key = jax.random.PRNGKey(0)
    kx, kw = jax.random.split(key)

    x = jax.random.normal(kx, (N, Cin, H, W), dtype=jnp.float32)

    # Deterministic kaiming_uniform_-style init (fan_in = Cin*9).
    fan_in = Cin * 3 * 3
    bound = float(np.sqrt(6.0 / fan_in))
    w = jax.random.uniform(kw, (Cout, Cin, 3, 3), dtype=jnp.float32,
                           minval=-bound, maxval=bound)
    gamma = jnp.ones((Cout,), jnp.float32)   # BatchNorm2d default affine params
    beta = jnp.zeros((Cout,), jnp.float32)

    ok = True
    for is_pool in (False, True):
        ref = reference(x, w, gamma, beta, is_pool)
        # Default bf16 MXU path (fast) and f32 path (bit-tight) both validated.
        out_bf16 = jax.block_until_ready(
            conv_block(x, w, gamma, beta, is_pool=is_pool))
        out_f32 = jax.block_until_ready(
            conv_block(x, w, gamma, beta, is_pool=is_pool,
                       matmul_dtype=jnp.float32))
        for name, out, tol in (("bf16", out_bf16, 5e-2), ("f32", out_f32, 1e-3)):
            good = (out.shape == ref.shape
                    and bool(jnp.allclose(out, ref, atol=tol, rtol=tol)))
            if not good:
                ok = False
                err = (float(jnp.max(jnp.abs(out - ref)))
                       if out.shape == ref.shape else float("nan"))
                print(f"MISMATCH is_pool={is_pool} dtype={name}: "
                      f"max_abs_err={err}")

    if ok:
        print("KERNEL_OK")
</pallas_src>

<mosaic_0001>
module attributes {stable_mosaic.version = 11 : i64} {
  func.func @kernel(%arg0: i32, %arg1: memref<512x36xbf16, #tpu.memory_space<vmem>>, %arg2: memref<36x128xbf16, #tpu.memory_space<vmem>>, %arg3: memref<1x2x128xf32, #tpu.memory_space<vmem>>) attributes {dimension_semantics = [#tpu.dimension_semantics<parallel>], iteration_bounds = array<i64: 1>, scalar_prefetch = 0 : i64, scratch_operands = 0 : i64, tpu.core_type = #tpu.core_type<tc>, window_params = [{transform_indices = @transform_0, window_bounds = array<i64: 512, 36>}, {pipeline_mode = #tpu.pipeline_mode<synchronous>, transform_indices = @transform_1, window_bounds = array<i64: 36, 128>}, {transform_indices = @transform_2, window_bounds = array<i64: 1, 2, 128>}]} {
    %c0 = arith.constant 0 : index
    %c0_0 = arith.constant 0 : index
    %0 = vector.load %arg2[%c0, %c0_0] : memref<36x128xbf16, #tpu.memory_space<vmem>>, vector<36x128xbf16>
    %cst = arith.constant 0.000000e+00 : f32
    %1 = vector.broadcast %cst : f32 to vector<1x128xf32>
    %c0_i32 = arith.constant 0 : i32
    %c256_i32 = arith.constant 256 : i32
    %2 = arith.muli %c0_i32, %c256_i32 : i32
    %3 = tpu.assume_multiple %2, 256 : i32
    %4 = arith.index_cast %3 : i32 to index
    %c0_1 = arith.constant 0 : index
    %5 = vector.load %arg1[%4, %c0_1] : memref<512x36xbf16, #tpu.memory_space<vmem>>, vector<256x36xbf16>
    %cst_2 = arith.constant dense<0.000000e+00> : vector<256x128xf32>
    %6 = tpu.matmul %5, %0, %cst_2 {dimension_numbers = #tpu.dot_dimension_numbers<[1], [0], [0], [1], [0, 0, 1, 1], [], []>} : vector<256x36xbf16>, vector<36x128xbf16>, vector<256x128xf32> -> vector<256x128xf32>
    %cst_3 = arith.constant dense<0.000000e+00> : vector<128xf32>
    %7 = vector.multi_reduction <add>, %6, %cst_3 [0] : vector<256x128xf32> to vector<128xf32>
    %8 = vector.shape_cast %7 : vector<128xf32> to vector<1x128xf32>
    %9 = arith.addf %1, %8 : vector<1x128xf32>
    %10 = arith.mulf %6, %6 : vector<256x128xf32>
    %cst_4 = arith.constant dense<0.000000e+00> : vector<128xf32>
    %11 = vector.multi_reduction <add>, %10, %cst_4 [0] : vector<256x128xf32> to vector<128xf32>
    %12 = vector.shape_cast %11 : vector<128xf32> to vector<1x128xf32>
    %13 = arith.addf %1, %12 : vector<1x128xf32>
    %c1_i32 = arith.constant 1 : i32
    %c256_i32_5 = arith.constant 256 : i32
    %14 = arith.muli %c1_i32, %c256_i32_5 : i32
    %15 = tpu.assume_multiple %14, 256 : i32
    %16 = arith.index_cast %15 : i32 to index
    %c0_6 = arith.constant 0 : index
    %17 = vector.load %arg1[%16, %c0_6] : memref<512x36xbf16, #tpu.memory_space<vmem>>, vector<256x36xbf16>
    %cst_7 = arith.constant dense<0.000000e+00> : vector<256x128xf32>
    %18 = tpu.matmul %17, %0, %cst_7 {dimension_numbers = #tpu.dot_dimension_numbers<[1], [0], [0], [1], [0, 0, 1, 1], [], []>} : vector<256x36xbf16>, vector<36x128xbf16>, vector<256x128xf32> -> vector<256x128xf32>
    %cst_8 = arith.constant dense<0.000000e+00> : vector<128xf32>
    %19 = vector.multi_reduction <add>, %18, %cst_8 [0] : vector<256x128xf32> to vector<128xf32>
    %20 = vector.shape_cast %19 : vector<128xf32> to vector<1x128xf32>
    %21 = arith.addf %9, %20 : vector<1x128xf32>
    %22 = arith.mulf %18, %18 : vector<256x128xf32>
    %cst_9 = arith.constant dense<0.000000e+00> : vector<128xf32>
    %23 = vector.multi_reduction <add>, %22, %cst_9 [0] : vector<256x128xf32> to vector<128xf32>
    %24 = vector.shape_cast %23 : vector<128xf32> to vector<1x128xf32>
    %25 = arith.addf %13, %24 : vector<1x128xf32>
    %c2_i32 = arith.constant 2 : i32
    %c0_10 = arith.constant 0 : index
    %c0_11 = arith.constant 0 : index
    %c0_12 = arith.constant 0 : index
    %26 = vector.load %arg3[%c0_10, %c0_11, %c0_12] : memref<1x2x128xf32, #tpu.memory_space<vmem>>, vector<1x1x128xf32>
    %27 = vector.shape_cast %26 : vector<1x1x128xf32> to vector<1x128xf32>
    %28 = vector.shape_cast %21 : vector<1x128xf32> to vector<1x1x128xf32>
    tpu.vector_store %arg3[%c0_10, %c0_11, %c0_12], %28 {strides = array<i32>} : memref<1x2x128xf32, #tpu.memory_space<vmem>>, vector<1x1x128xf32>,
    %c0_13 = arith.constant 0 : index
    %c1 = arith.constant 1 : index
    %c0_14 = arith.constant 0 : index
    %29 = vector.load %arg3[%c0_13, %c1, %c0_14] : memref<1x2x128xf32, #tpu.memory_space<vmem>>, vector<1x1x128xf32>
    %30 = vector.shape_cast %29 : vector<1x1x128xf32> to vector<1x128xf32>
    %31 = vector.shape_cast %25 : vector<1x128xf32> to vector<1x1x128xf32>
    tpu.vector_store %arg3[%c0_13, %c1, %c0_14], %31 {strides = array<i32>} : memref<1x2x128xf32, #tpu.memory_space<vmem>>, vector<1x1x128xf32>,
    return
  }
  func.func @transform_0(%arg0: i32) -> (i32, i32) {
    %c0_i32 = arith.constant 0 : i32
    %c0_i32_0 = arith.constant 0 : i32
    return %arg0, %c0_i32 : i32, i32
  }
  func.func @transform_1(%arg0: i32) -> (i32, i32) {
    %c0_i32 = arith.constant 0 : i32
    %c0_i32_0 = arith.constant 0 : i32
    %c0_i32_1 = arith.constant 0 : i32
    return %c0_i32, %c0_i32_0 : i32, i32
  }
  func.func @transform_2(%arg0: i32) -> (i32, i32, i32) {
    %c0_i32 = arith.constant 0 : i32
    %c0_i32_0 = arith.constant 0 : i32
    %c0_i32_1 = arith.constant 0 : i32
    return %arg0, %c0_i32, %c0_i32_0 : i32, i32, i32
  }
}

module attributes {stable_mosaic.version = 11 : i64} {
  func.func @kernel(%arg0: i32, %arg1: memref<512x36xbf16, #tpu.memory_space<vmem>>, %arg2: memref<36x128xbf16, #tpu.memory_space<vmem>>, %arg3: memref<1x128xf32, #tpu.memory_space<vmem>>, %arg4: memref<1x128xf32, #tpu.memory_space<vmem>>, %arg5: memref<512x128xf32, #tpu.memory_space<vmem>>) attributes {dimension_semantics = [#tpu.dimension_semantics<parallel>], iteration_bounds = array<i64: 1>, scalar_prefetch = 0 : i64, scratch_operands = 0 : i64, tpu.core_type = #tpu.core_type<tc>, window_params = [{transform_indices = @transform_0, window_bounds = array<i64: 512, 36>}, {pipeline_mode = #tpu.pipeline_mode<synchronous>, transform_indices = @transform_1, window_bounds = array<i64: 36, 128>}, {pipeline_mode = #tpu.pipeline_mode<synchronous>, transform_indices = @transform_2, window_bounds = array<i64: 1, 128>}, {pipeline_mode = #tpu.pipeline_mode<synchronous>, transform_indices = @transform_3, window_bounds = array<i64: 1, 128>}, {transform_indices = @transform_4, window_bounds = array<i64: 512, 128>}]} {
    %c0 = arith.constant 0 : index
    %c0_0 = arith.constant 0 : index
    %0 = vector.load %arg2[%c0, %c0_0] : memref<36x128xbf16, #tpu.memory_space<vmem>>, vector<36x128xbf16>
    %c0_1 = arith.constant 0 : index
    %c0_2 = arith.constant 0 : index
    %1 = vector.load %arg3[%c0_1, %c0_2] : memref<1x128xf32, #tpu.memory_space<vmem>>, vector<1x128xf32>
    %c0_3 = arith.constant 0 : index
    %c0_4 = arith.constant 0 : index
    %2 = vector.load %arg4[%c0_3, %c0_4] : memref<1x128xf32, #tpu.memory_space<vmem>>, vector<1x128xf32>
    %c0_i32 = arith.constant 0 : i32
    %c256_i32 = arith.constant 256 : i32
    %3 = arith.muli %c0_i32, %c256_i32 : i32
    %4 = tpu.assume_multiple %3, 256 : i32
    %5 = arith.index_cast %4 : i32 to index
    %c0_5 = arith.constant 0 : index
    %6 = vector.load %arg1[%5, %c0_5] : memref<512x36xbf16, #tpu.memory_space<vmem>>, vector<256x36xbf16>
    %cst = arith.constant dense<0.000000e+00> : vector<256x128xf32>
    %7 = tpu.matmul %6, %0, %cst {dimension_numbers = #tpu.dot_dimension_numbers<[1], [0], [0], [1], [0, 0, 1, 1], [], []>} : vector<256x36xbf16>, vector<36x128xbf16>, vector<256x128xf32> -> vector<256x128xf32>
    %8 = vector.broadcast %1 : vector<1x128xf32> to vector<256x128xf32>
    %9 = arith.mulf %7, %8 : vector<256x128xf32>
    %10 = vector.broadcast %2 : vector<1x128xf32> to vector<256x128xf32>
    %11 = arith.addf %9, %10 : vector<256x128xf32>
    %cst_6 = arith.constant 0.000000e+00 : f32
    %12 = vector.broadcast %cst_6 : f32 to vector<256x128xf32>
    %13 = arith.maximumf %11, %12 : vector<256x128xf32>
    %14 = arith.index_cast %4 : i32 to index
    %c0_7 = arith.constant 0 : index
    %15 = vector.load %arg5[%14, %c0_7] : memref<512x128xf32, #tpu.memory_space<vmem>>, vector<256x128xf32>
    tpu.vector_store %arg5[%14, %c0_7], %13 {strides = array<i32>} : memref<512x128xf32, #tpu.memory_space<vmem>>, vector<256x128xf32>,
    %c1_i32 = arith.constant 1 : i32
    %c256_i32_8 = arith.constant 256 : i32
    %16 = arith.muli %c1_i32, %c256_i32_8 : i32
    %17 = tpu.assume_multiple %16, 256 : i32
    %18 = arith.index_cast %17 : i32 to index
    %c0_9 = arith.constant 0 : index
    %19 = vector.load %arg1[%18, %c0_9] : memref<512x36xbf16, #tpu.memory_space<vmem>>, vector<256x36xbf16>
    %cst_10 = arith.constant dense<0.000000e+00> : vector<256x128xf32>
    %20 = tpu.matmul %19, %0, %cst_10 {dimension_numbers = #tpu.dot_dimension_numbers<[1], [0], [0], [1], [0, 0, 1, 1], [], []>} : vector<256x36xbf16>, vector<36x128xbf16>, vector<256x128xf32> -> vector<256x128xf32>
    %21 = vector.broadcast %1 : vector<1x128xf32> to vector<256x128xf32>
    %22 = arith.mulf %20, %21 : vector<256x128xf32>
    %23 = vector.broadcast %2 : vector<1x128xf32> to vector<256x128xf32>
    %24 = arith.addf %22, %23 : vector<256x128xf32>
    %cst_11 = arith.constant 0.000000e+00 : f32
    %25 = vector.broadcast %cst_11 : f32 to vector<256x128xf32>
    %26 = arith.maximumf %24, %25 : vector<256x128xf32>
    %27 = arith.index_cast %17 : i32 to index
    %c0_12 = arith.constant 0 : index
    %28 = vector.load %arg5[%27, %c0_12] : memref<512x128xf32, #tpu.memory_space<vmem>>, vector<256x128xf32>
    tpu.vector_store %arg5[%27, %c0_12], %26 {strides = array<i32>} : memref<512x128xf32, #tpu.memory_space<vmem>>, vector<256x128xf32>,
    %c2_i32 = arith.constant 2 : i32
    return
  }
  func.func @transform_0(%arg0: i32) -> (i32, i32) {
    %c0_i32 = arith.constant 0 : i32
    %c0_i32_0 = arith.constant 0 : i32
    return %arg0, %c0_i32 : i32, i32
  }
  func.func @transform_1(%arg0: i32) -> (i32, i32) {
    %c0_i32 = arith.constant 0 : i32
    %c0_i32_0 = arith.constant 0 : i32
    %c0_i32_1 = arith.constant 0 : i32
    return %c0_i32, %c0_i32_0 : i32, i32
  }
  func.func @transform_2(%arg0: i32) -> (i32, i32) {
    %c0_i32 = arith.constant 0 : i32
    %c0_i32_0 = arith.constant 0 : i32
    %c0_i32_1 = arith.constant 0 : i32
    return %c0_i32, %c0_i32_0 : i32, i32
  }
  func.func @transform_3(%arg0: i32) -> (i32, i32) {
    %c0_i32 = arith.constant 0 : i32
    %c0_i32_0 = arith.constant 0 : i32
    %c0_i32_1 = arith.constant 0 : i32
    return %c0_i32, %c0_i32_0 : i32, i32
  }
  func.func @transform_4(%arg0: i32) -> (i32, i32) {
    %c0_i32 = arith.constant 0 : i32
    %c0_i32_0 = arith.constant 0 : i32
    return %arg0, %c0_i32 : i32, i32
  }
}

</mosaic_0001>

<llo_original>
// kernel: conv_block.2
$region0: #{conv_block.2}
  #allocation0 [shape = 'u32[]', space=smem, size = 0x4, offset = 0x4, fixed_abs, tag = 'smem constant byte address 0x4 - core index']
  #allocation1 [shape = 'u32[72,128]{1,0:T(1,128)}', space=vmem, size = 0x9000, scoped, tag = 'internal scratch']
  %s0 = inlined_call_operand.vmem [shape: bf16[512,36], index: 0, kind: input, shape index: {}]
  %s1 = inlined_call_operand.vmem [shape: bf16[36,128], index: 1, kind: input, shape index: {}]
  %s2 = inlined_call_operand.vmem [shape: f32[1,2,128], index: 2, kind: output, shape index: {}]
  %s3 = sld [smem:[#allocation0]]
  $region18: #{conv_block.2} parent=0
    _
  %s5 = ssub.s32 1, %s3
  %s6 = scalar_select 0, %s5, %s3
  // Predicated region
  $region2: #{conv_block.2} parent=0 // pred_check
    _
  $region3: #{conv_block.2} parent=0 // pred_check_branch
    %8 = sbr.rel (0) target = $region5
  $region4: #{conv_block.2} parent=0 // pred_region
    _
  $region5: #{conv_block.2} parent=0 // pred_fallthru
    _
  // Predicated region
  $region6: #{conv_block.2} parent=0 // pred_check
    _
  $region7: #{conv_block.2} parent=0 // pred_check_branch
    %10 = sbr.rel (0) target = $region9
  $region8: #{conv_block.2} parent=0 // pred_region
    _
  $region9: #{conv_block.2} parent=0 // pred_fallthru
    _
  %v12 = vld [vmem:[%s1] sm:$0xf]
  %v13 = vld [vmem:[%s1 + $0x4] sm:$0xf]
  %v14 = vld [vmem:[%s1 + $0x8] sm:$0xf]
  %v15 = vld [vmem:[%s1 + $0xc] sm:$0xf]
  %v16 = vld [vmem:[%s1 + $0x10] sm:$0x3]
  %v17 = vld [vmem:[%s0] sm:$0xf]
  %v18 = vld [vmem:[%s0 + $0x4] sm:$0xf]
  %v19 = vld [vmem:[%s0 + $0x8] sm:$0xf]
  %v20 = vld [vmem:[%s0 + $0xc] sm:$0xf]
  %v21 = vld [vmem:[%s0 + $0x10] sm:$0xf]
  %v22 = vld [vmem:[%s0 + $0x14] sm:$0xf]
  %v23 = vld [vmem:[%s0 + $0x18] sm:$0xf]
  %v24 = vld [vmem:[%s0 + $0x1c] sm:$0xf]
  %v25 = vld [vmem:[%s0 + $0x20] sm:$0xf]
  %v26 = vld [vmem:[%s0 + $0x24] sm:$0xf]
  %v27 = vld [vmem:[%s0 + $0x28] sm:$0xf]
  %v28 = vld [vmem:[%s0 + $0x2c] sm:$0xf]
  %v29 = vld [vmem:[%s0 + $0x30] sm:$0xf]
  %v30 = vld [vmem:[%s0 + $0x34] sm:$0xf]
  %v31 = vld [vmem:[%s0 + $0x38] sm:$0xf]
  %v32 = vld [vmem:[%s0 + $0x3c] sm:$0xf]
  %v33 = vld [vmem:[%s0 + $0x40] sm:$0xf]
  %v34 = vld [vmem:[%s0 + $0x44] sm:$0xf]
  %v35 = vld [vmem:[%s0 + $0x48] sm:$0xf]
  %v36 = vld [vmem:[%s0 + $0x4c] sm:$0xf]
  %v37 = vld [vmem:[%s0 + $0x50] sm:$0xf]
  %v38 = vld [vmem:[%s0 + $0x54] sm:$0xf]
  %v39 = vld [vmem:[%s0 + $0x58] sm:$0xf]
  %v40 = vld [vmem:[%s0 + $0x5c] sm:$0xf]
  %v41 = vld [vmem:[%s0 + $0x60] sm:$0xf]
  %v42 = vld [vmem:[%s0 + $0x64] sm:$0xf]
  %v43 = vld [vmem:[%s0 + $0x68] sm:$0xf]
  %v44 = vld [vmem:[%s0 + $0x6c] sm:$0xf]
  %v45 = vld [vmem:[%s0 + $0x70] sm:$0xf]
  %v46 = vld [vmem:[%s0 + $0x74] sm:$0xf]
  %v47 = vld [vmem:[%s0 + $0x78] sm:$0xf]
  %v48 = vld [vmem:[%s0 + $0x7c] sm:$0xf]
  %v81 = vunpack.c.l.b16 %v17
  %v82 = vunpack.c.l.b16 %v18
  %v83 = vunpack.c.l.b16 %v19
  %v84 = vunpack.c.l.b16 %v20
  %v85 = vunpack.c.l.b16 %v21
  %v86 = vunpack.c.l.b16 %v22
  %v87 = vunpack.c.l.b16 %v23
  %v88 = vunpack.c.l.b16 %v24
  %v89 = vunpack.c.l.b16 %v25
  %v90 = vunpack.c.l.b16 %v26
  %v91 = vunpack.c.l.b16 %v27
  %v92 = vunpack.c.l.b16 %v28
  %v93 = vunpack.c.l.b16 %v29
  %v94 = vunpack.c.l.b16 %v30
  %v95 = vunpack.c.l.b16 %v31
  %v96 = vunpack.c.l.b16 %v32
  %v97 = vunpack.c.l.b16 %v33
  %v98 = vunpack.c.l.b16 %v34
  %v99 = vunpack.c.l.b16 %v35
  %v100 = vunpack.c.l.b16 %v36
  %v101 = vunpack.c.l.b16 %v37
  %v102 = vunpack.c.l.b16 %v38
  %v103 = vunpack.c.l.b16 %v39
  %v104 = vunpack.c.l.b16 %v40
  %v105 = vunpack.c.l.b16 %v41
  %v106 = vunpack.c.l.b16 %v42
  %v107 = vunpack.c.l.b16 %v43
  %v108 = vunpack.c.l.b16 %v44
  %v109 = vunpack.c.l.b16 %v45
  %v110 = vunpack.c.l.b16 %v46
  %v111 = vunpack.c.l.b16 %v47
  %v112 = vunpack.c.l.b16 %v48
  %v113 = vpack.c.b16 %v82, %v81
  %v114 = vpack.c.b16 %v84, %v83
  %v115 = vpack.c.b16 %v86, %v85
  %v116 = vpack.c.b16 %v88, %v87
  %v117 = vpack.c.b16 %v90, %v89
  %v118 = vpack.c.b16 %v92, %v91
  %v119 = vpack.c.b16 %v94, %v93
  %v120 = vpack.c.b16 %v96, %v95
  %v121 = vpack.c.b16 %v98, %v97
  %v122 = vpack.c.b16 %v100, %v99
  %v123 = vpack.c.b16 %v102, %v101
  %v124 = vpack.c.b16 %v104, %v103
  %v125 = vpack.c.b16 %v106, %v105
  %v126 = vpack.c.b16 %v108, %v107
  %v127 = vpack.c.b16 %v110, %v109
  %v128 = vpack.c.b16 %v112, %v111
  %v134 = vunpack.c.l.b16 %v12
  %v135 = vunpack.c.l.b16 %v13
  %v136 = vunpack.c.l.b16 %v14
  %v137 = vunpack.c.l.b16 %v15
  %v138 = vunpack.c.l.b16 %v16
  %v139 = vpack.c.b16 %v135, %v134
  %v140 = vpack.c.b16 %v137, %v136
  %v141 = vpack.c.b16 %v138, %v138
  %vm144 = vcmask 293888
  %v146 = vsel %vm144, %v113, 0
  %v149 = vsel %vm144, %v114, 0
  %v152 = vsel %vm144, %v115, 0
  %v155 = vsel %vm144, %v116, 0
  %v158 = vsel %vm144, %v117, 0
  %v161 = vsel %vm144, %v118, 0
  %v164 = vsel %vm144, %v119, 0
  %v167 = vsel %vm144, %v120, 0
  %v170 = vsel %vm144, %v121, 0
  %v173 = vsel %vm144, %v122, 0
  %v176 = vsel %vm144, %v123, 0
  %v179 = vsel %vm144, %v124, 0
  %v182 = vsel %vm144, %v125, 0
  %v185 = vsel %vm144, %v126, 0
  %v188 = vsel %vm144, %v127, 0
  %v191 = vsel %vm144, %v128, 0
  %vm193 = vcmask 1041408
  %v195 = vsel %vm193, %v141, 0
  %197 = vmatpush.bf16.msra.mxu0 0
  %198 = vmatpush.bf16.msra.mxu0 0
  %199 = vmatpush.bf16.msra.mxu0 0
  %200 = vmatpush.bf16.msra.mxu0 0
  %201 = vmatpush.bf16.msra.mxu0 0
  %202 = vmatpush.bf16.msra.mxu0 %v195
  %203 = vmatpush.bf16.msra.mxu0 %v140
  %204 = vmatpush.bf16.msra.mxu0 %v139
  %205 = vmatmul.bf16.gmra.mxu0 %v146
  %v206 = vpop.f32.mrf.mxu0
  %v207 = vadd.f32 0.0, %v206
  %v208 = vpop.f32.mrf.mxu0
  %v209 = vadd.f32 0.0, %v208
  %210 = vmatmul.bf16.gmra.mxu0 %v149
  %v211 = vpop.f32.mrf.mxu0
  %v212 = vadd.f32 0.0, %v211
  %v213 = vpop.f32.mrf.mxu0
  %v214 = vadd.f32 0.0, %v213
  %215 = vmatmul.bf16.gmra.mxu0 %v152
  %v216 = vpop.f32.mrf.mxu0
  %v217 = vadd.f32 0.0, %v216
  %v218 = vpop.f32.mrf.mxu0
  %v219 = vadd.f32 0.0, %v218
  %220 = vmatmul.bf16.gmra.mxu0 %v155
  %v221 = vpop.f32.mrf.mxu0
  %v222 = vadd.f32 0.0, %v221
  %v223 = vpop.f32.mrf.mxu0
  %v224 = vadd.f32 0.0, %v223
  %225 = vmatmul.bf16.gmra.mxu0 %v158
  %v226 = vpop.f32.mrf.mxu0
  %v227 = vadd.f32 0.0, %v226
  %v228 = vpop.f32.mrf.mxu0
  %v229 = vadd.f32 0.0, %v228
  %230 = vmatmul.bf16.gmra.mxu0 %v161
  %v231 = vpop.f32.mrf.mxu0
  %v232 = vadd.f32 0.0, %v231
  %v233 = vpop.f32.mrf.mxu0
  %v234 = vadd.f32 0.0, %v233
  %235 = vmatmul.bf16.gmra.mxu0 %v164
  %v236 = vpop.f32.mrf.mxu0
  %v237 = vadd.f32 0.0, %v236
  %v238 = vpop.f32.mrf.mxu0
  %v239 = vadd.f32 0.0, %v238
  %240 = vmatmul.bf16.gmra.mxu0 %v167
  %v241 = vpop.f32.mrf.mxu0
  %v242 = vadd.f32 0.0, %v241
  %v243 = vpop.f32.mrf.mxu0
  %v244 = vadd.f32 0.0, %v243
  %245 = vmatmul.bf16.gmra.mxu0 %v170
  %v246 = vpop.f32.mrf.mxu0
  %v247 = vadd.f32 0.0, %v246
  %v248 = vpop.f32.mrf.mxu0
  %v249 = vadd.f32 0.0, %v248
  %250 = vmatmul.bf16.gmra.mxu0 %v173
  %v251 = vpop.f32.mrf.mxu0
  %v252 = vadd.f32 0.0, %v251
  %v253 = vpop.f32.mrf.mxu0
  %v254 = vadd.f32 0.0, %v253
  %255 = vmatmul.bf16.gmra.mxu0 %v176
  %v256 = vpop.f32.mrf.mxu0
  %v257 = vadd.f32 0.0, %v256
  %v258 = vpop.f32.mrf.mxu0
  %v259 = vadd.f32 0.0, %v258
  %260 = vmatmul.bf16.gmra.mxu0 %v179
  %v261 = vpop.f32.mrf.mxu0
  %v262 = vadd.f32 0.0, %v261
  %v263 = vpop.f32.mrf.mxu0
  %v264 = vadd.f32 0.0, %v263
  %265 = vmatmul.bf16.gmra.mxu0 %v182
  %v266 = vpop.f32.mrf.mxu0
  %v267 = vadd.f32 0.0, %v266
  %v268 = vpop.f32.mrf.mxu0
  %v269 = vadd.f32 0.0, %v268
  %270 = vmatmul.bf16.gmra.mxu0 %v185
  %v271 = vpop.f32.mrf.mxu0
  %v272 = vadd.f32 0.0, %v271
  %v273 = vpop.f32.mrf.mxu0
  %v274 = vadd.f32 0.0, %v273
  %275 = vmatmul.bf16.gmra.mxu0 %v188
  %v276 = vpop.f32.mrf.mxu0
  %v277 = vadd.f32 0.0, %v276
  %v278 = vpop.f32.mrf.mxu0
  %v279 = vadd.f32 0.0, %v278
  %280 = vmatmul.bf16.gmra.mxu0 %v191
  %v281 = vpop.f32.mrf.mxu0
  %v282 = vadd.f32 0.0, %v281
  %v283 = vpop.f32.mrf.mxu0
  %v284 = vadd.f32 0.0, %v283
  %285 = vdwg.mxu0
  %v286 = vadd.f32 %v207, %v209
  %v287 = vadd.f32 %v286, %v212
  %v288 = vadd.f32 %v287, %v214
  %v289 = vadd.f32 %v288, %v217
  %v290 = vadd.f32 %v289, %v219
  %v291 = vadd.f32 %v290, %v222
  %v292 = vadd.f32 %v291, %v224
  %v293 = vadd.f32 %v292, %v227
  %v294 = vadd.f32 %v293, %v229
  %v295 = vadd.f32 %v294, %v232
  %v296 = vadd.f32 %v295, %v234
  %v297 = vadd.f32 %v296, %v237
  %v298 = vadd.f32 %v297, %v239
  %v299 = vadd.f32 %v298, %v242
  %v300 = vadd.f32 %v299, %v244
  %v301 = vadd.f32 %v300, %v247
  %v302 = vadd.f32 %v301, %v249
  %v303 = vadd.f32 %v302, %v252
  %v304 = vadd.f32 %v303, %v254
  %v305 = vadd.f32 %v304, %v257
  %v306 = vadd.f32 %v305, %v259
  %v307 = vadd.f32 %v306, %v262
  %v308 = vadd.f32 %v307, %v264
  %v309 = vadd.f32 %v308, %v267
  %v310 = vadd.f32 %v309, %v269
  %v311 = vadd.f32 %v310, %v272
  %v312 = vadd.f32 %v311, %v274
  %v313 = vadd.f32 %v312, %v277
  %v314 = vadd.f32 %v313, %v279
  %v315 = vadd.f32 %v314, %v282
  %v316 = vadd.f32 %v315, %v284
  %v317 = vrot.slane %v316, 4
  %v318 = vadd.f32 %v316, %v317
  %v319 = vrot.slane %v318, 2
  %v320 = vadd.f32 %v318, %v319
  %v321 = vrot.slane %v320, 1
  %v322 = vadd.f32 %v320, %v321
  %v323 = vadd.f32 %v322, 0.0
  %v324 = vmul.f32 %v207, %v207
  %v325 = vmul.f32 %v209, %v209
  %v326 = vmul.f32 %v212, %v212
  %v327 = vmul.f32 %v214, %v214
  %v328 = vmul.f32 %v217, %v217
  %v329 = vmul.f32 %v219, %v219
  %v330 = vmul.f32 %v222, %v222
  %v331 = vmul.f32 %v224, %v224
  %v332 = vmul.f32 %v227, %v227
  %v333 = vmul.f32 %v229, %v229
  %v334 = vmul.f32 %v232, %v232
  %v335 = vmul.f32 %v234, %v234
  %v336 = vmul.f32 %v237, %v237
  %v337 = vmul.f32 %v239, %v239
  %v338 = vmul.f32 %v242, %v242
  %v339 = vmul.f32 %v244, %v244
  %v340 = vmul.f32 %v247, %v247
  %v341 = vmul.f32 %v249, %v249
  %v342 = vmul.f32 %v252, %v252
  %v343 = vmul.f32 %v254, %v254
  %v344 = vmul.f32 %v257, %v257
  %v345 = vmul.f32 %v259, %v259
  %v346 = vmul.f32 %v262, %v262
  %v347 = vmul.f32 %v264, %v264
  %v348 = vmul.f32 %v267, %v267
  %v349 = vmul.f32 %v269, %v269
  %v350 = vmul.f32 %v272, %v272
  %v351 = vmul.f32 %v274, %v274
  %v352 = vmul.f32 %v277, %v277
  %v353 = vmul.f32 %v279, %v279
  %v354 = vmul.f32 %v282, %v282
  %v355 = vmul.f32 %v284, %v284
  %v356 = vadd.f32 %v324, %v325
  %v357 = vadd.f32 %v356, %v326
  %v358 = vadd.f32 %v357, %v327
  %v359 = vadd.f32 %v358, %v328
  %v360 = vadd.f32 %v359, %v329
  %v361 = vadd.f32 %v360, %v330
  %v362 = vadd.f32 %v361, %v331
  %v363 = vadd.f32 %v362, %v332
  %v364 = vadd.f32 %v363, %v333
  %v365 = vadd.f32 %v364, %v334
  %v366 = vadd.f32 %v365, %v335
  %v367 = vadd.f32 %v366, %v336
  %v368 = vadd.f32 %v367, %v337
  %v369 = vadd.f32 %v368, %v338
  %v370 = vadd.f32 %v369, %v339
  %v371 = vadd.f32 %v370, %v340
  %v372 = vadd.f32 %v371, %v341
  %v373 = vadd.f32 %v372, %v342
  %v374 = vadd.f32 %v373, %v343
  %v375 = vadd.f32 %v374, %v344
  %v376 = vadd.f32 %v375, %v345
  %v377 = vadd.f32 %v376, %v346
  %v378 = vadd.f32 %v377, %v347
  %v379 = vadd.f32 %v378, %v348
  %v380 = vadd.f32 %v379, %v349
  %v381 = vadd.f32 %v380, %v350
  %v382 = vadd.f32 %v381, %v351
  %v383 = vadd.f32 %v382, %v352
  %v384 = vadd.f32 %v383, %v353
  %v385 = vadd.f32 %v384, %v354
  %v386 = vadd.f32 %v385, %v355
  %v387 = vrot.slane %v386, 4
  %v388 = vadd.f32 %v386, %v387
  %v389 = vrot.slane %v388, 2
  %v390 = vadd.f32 %v388, %v389
  %v391 = vrot.slane %v390, 1
  %v392 = vadd.f32 %v390, %v391
  %v393 = vadd.f32 %v392, 0.0
  %s394 = scalar_lea.vmem %s0, 128
  %v395 = vld [vmem:[%s394] sm:$0xf]
  %v396 = vld [vmem:[%s394 + $0x4] sm:$0xf]
  %v397 = vld [vmem:[%s394 + $0x8] sm:$0xf]
  %v398 = vld [vmem:[%s394 + $0xc] sm:$0xf]
  %v399 = vld [vmem:[%s394 + $0x10] sm:$0xf]
  %v400 = vld [vmem:[%s394 + $0x14] sm:$0xf]
  %v401 = vld [vmem:[%s394 + $0x18] sm:$0xf]
  %v402 = vld [vmem:[%s394 + $0x1c] sm:$0xf]
  %v403 = vld [vmem:[%s394 + $0x20] sm:$0xf]
  %v404 = vld [vmem:[%s394 + $0x24] sm:$0xf]
  %v405 = vld [vmem:[%s394 + $0x28] sm:$0xf]
  %v406 = vld [vmem:[%s394 + $0x2c] sm:$0xf]
  %v407 = vld [vmem:[%s394 + $0x30] sm:$0xf]
  %v408 = vld [vmem:[%s394 + $0x34] sm:$0xf]
  %v409 = vld [vmem:[%s394 + $0x38] sm:$0xf]
  %v410 = vld [vmem:[%s394 + $0x3c] sm:$0xf]
  %v411 = vld [vmem:[%s394 + $0x40] sm:$0xf]
  %v412 = vld [vmem:[%s394 + $0x44] sm:$0xf]
  %v413 = vld [vmem:[%s394 + $0x48] sm:$0xf]
  %v414 = vld [vmem:[%s394 + $0x4c] sm:$0xf]
  %v415 = vld [vmem:[%s394 + $0x50] sm:$0xf]
  %v416 = vld [vmem:[%s394 + $0x54] sm:$0xf]
  %v417 = vld [vmem:[%s394 + $0x58] sm:$0xf]
  %v418 = vld [vmem:[%s394 + $0x5c] sm:$0xf]
  %v419 = vld [vmem:[%s394 + $0x60] sm:$0xf]
  %v420 = vld [vmem:[%s394 + $0x64] sm:$0xf]
  %v421 = vld [vmem:[%s394 + $0x68] sm:$0xf]
  %v422 = vld [vmem:[%s394 + $0x6c] sm:$0xf]
  %v423 = vld [vmem:[%s394 + $0x70] sm:$0xf]
  %v424 = vld [vmem:[%s394 + $0x74] sm:$0xf]
  %v425 = vld [vmem:[%s394 + $0x78] sm:$0xf]
  %v426 = vld [vmem:[%s394 + $0x7c] sm:$0xf]
  %v459 = vunpack.c.l.b16 %v395
  %v460 = vunpack.c.l.b16 %v396
  %v461 = vunpack.c.l.b16 %v397
  %v462 = vunpack.c.l.b16 %v398
  %v463 = vunpack.c.l.b16 %v399
  %v464 = vunpack.c.l.b16 %v400
  %v465 = vunpack.c.l.b16 %v401
  %v466 = vunpack.c.l.b16 %v402
  %v467 = vunpack.c.l.b16 %v403
  %v468 = vunpack.c.l.b16 %v404
  %v469 = vunpack.c.l.b16 %v405
  %v470 = vunpack.c.l.b16 %v406
  %v471 = vunpack.c.l.b16 %v407
  %v472 = vunpack.c.l.b16 %v408
  %v473 = vunpack.c.l.b16 %v409
  %v474 = vunpack.c.l.b16 %v410
  %v475 = vunpack.c.l.b16 %v411
  %v476 = vunpack.c.l.b16 %v412
  %v477 = vunpack.c.l.b16 %v413
  %v478 = vunpack.c.l.b16 %v414
  %v479 = vunpack.c.l.b16 %v415
  %v480 = vunpack.c.l.b16 %v416
  %v481 = vunpack.c.l.b16 %v417
  %v482 = vunpack.c.l.b16 %v418
  %v483 = vunpack.c.l.b16 %v419
  %v484 = vunpack.c.l.b16 %v420
  %v485 = vunpack.c.l.b16 %v421
  %v486 = vunpack.c.l.b16 %v422
  %v487 = vunpack.c.l.b16 %v423
  %v488 = vunpack.c.l.b16 %v424
  %v489 = vunpack.c.l.b16 %v425
  %v490 = vunpack.c.l.b16 %v426
  %v491 = vpack.c.b16 %v460, %v459
  %v492 = vpack.c.b16 %v462, %v461
  %v493 = vpack.c.b16 %v464, %v463
  %v494 = vpack.c.b16 %v466, %v465
  %v495 = vpack.c.b16 %v468, %v467
  %v496 = vpack.c.b16 %v470, %v469
  %v497 = vpack.c.b16 %v472, %v471
  %v498 = vpack.c.b16 %v474, %v473
  %v499 = vpack.c.b16 %v476, %v475
  %v500 = vpack.c.b16 %v478, %v477
  %v501 = vpack.c.b16 %v480, %v479
  %v502 = vpack.c.b16 %v482, %v481
  %v503 = vpack.c.b16 %v484, %v483
  %v504 = vpack.c.b16 %v486, %v485
  %v505 = vpack.c.b16 %v488, %v487
  %v506 = vpack.c.b16 %v490, %v489
  %v508 = vsel %vm144, %v491, 0
  %v511 = vsel %vm144, %v492, 0
  %v514 = vsel %vm144, %v493, 0
  %v517 = vsel %vm144, %v494, 0
  %v520 = vsel %vm144, %v495, 0
  %v523 = vsel %vm144, %v496, 0
  %v526 = vsel %vm144, %v497, 0
  %v529 = vsel %vm144, %v498, 0
  %v532 = vsel %vm144, %v499, 0
  %v535 = vsel %vm144, %v500, 0
  %v538 = vsel %vm144, %v501, 0
  %v541 = vsel %vm144, %v502, 0
  %v544 = vsel %vm144, %v503, 0
  %v547 = vsel %vm144, %v504, 0
  %v550 = vsel %vm144, %v505, 0
  %v553 = vsel %vm144, %v506, 0
  %555 = vmatpush.bf16.msra.mxu0 0
  %556 = vmatpush.bf16.msra.mxu0 0
  %557 = vmatpush.bf16.msra.mxu0 0
  %558 = vmatpush.bf16.msra.mxu0 0
  %559 = vmatpush.bf16.msra.mxu0 0
  %560 = vmatpush.bf16.msra.mxu0 %v195
  %561 = vmatpush.bf16.msra.mxu0 %v140
  %562 = vmatpush.bf16.msra.mxu0 %v139
  %563 = vmatmul.bf16.gmra.mxu0 %v508
  %v564 = vpop.f32.mrf.mxu0
  %v565 = vadd.f32 0.0, %v564
  %v566 = vpop.f32.mrf.mxu0
  %v567 = vadd.f32 0.0, %v566
  %568 = vmatmul.bf16.gmra.mxu0 %v511
  %v569 = vpop.f32.mrf.mxu0
  %v570 = vadd.f32 0.0, %v569
  %v571 = vpop.f32.mrf.mxu0
  %v572 = vadd.f32 0.0, %v571
  %573 = vmatmul.bf16.gmra.mxu0 %v514
  %v574 = vpop.f32.mrf.mxu0
  %v575 = vadd.f32 0.0, %v574
  %v576 = vpop.f32.mrf.mxu0
  %v577 = vadd.f32 0.0, %v576
  %578 = vmatmul.bf16.gmra.mxu0 %v517
  %v579 = vpop.f32.mrf.mxu0
  %v580 = vadd.f32 0.0, %v579
  %v581 = vpop.f32.mrf.mxu0
  %v582 = vadd.f32 0.0, %v581
  %583 = vmatmul.bf16.gmra.mxu0 %v520
  %v584 = vpop.f32.mrf.mxu0
  %v585 = vadd.f32 0.0, %v584
  %v586 = vpop.f32.mrf.mxu0
  %v587 = vadd.f32 0.0, %v586
  %588 = vmatmul.bf16.gmra.mxu0 %v523
  %v589 = vpop.f32.mrf.mxu0
  %v590 = vadd.f32 0.0, %v589
  %v591 = vpop.f32.mrf.mxu0
  %v592 = vadd.f32 0.0, %v591
  %593 = vmatmul.bf16.gmra.mxu0 %v526
  %v594 = vpop.f32.mrf.mxu0
  %v595 = vadd.f32 0.0, %v594
  %v596 = vpop.f32.mrf.mxu0
  %v597 = vadd.f32 0.0, %v596
  %598 = vmatmul.bf16.gmra.mxu0 %v529
  %v599 = vpop.f32.mrf.mxu0
  %v600 = vadd.f32 0.0, %v599
  %v601 = vpop.f32.mrf.mxu0
  %v602 = vadd.f32 0.0, %v601
  %603 = vmatmul.bf16.gmra.mxu0 %v532
  %v604 = vpop.f32.mrf.mxu0
  %v605 = vadd.f32 0.0, %v604
  %v606 = vpop.f32.mrf.mxu0
  %v607 = vadd.f32 0.0, %v606
  %608 = vmatmul.bf16.gmra.mxu0 %v535
  %v609 = vpop.f32.mrf.mxu0
  %v610 = vadd.f32 0.0, %v609
  %v611 = vpop.f32.mrf.mxu0
  %v612 = vadd.f32 0.0, %v611
  %613 = vmatmul.bf16.gmra.mxu0 %v538
  %v614 = vpop.f32.mrf.mxu0
  %v615 = vadd.f32 0.0, %v614
  %v616 = vpop.f32.mrf.mxu0
  %v617 = vadd.f32 0.0, %v616
  %618 = vmatmul.bf16.gmra.mxu0 %v541
  %v619 = vpop.f32.mrf.mxu0
  %v620 = vadd.f32 0.0, %v619
  %v621 = vpop.f32.mrf.mxu0
  %v622 = vadd.f32 0.0, %v621
  %623 = vmatmul.bf16.gmra.mxu0 %v544
  %v624 = vpop.f32.mrf.mxu0
  %v625 = vadd.f32 0.0, %v624
  %v626 = vpop.f32.mrf.mxu0
  %v627 = vadd.f32 0.0, %v626
  %628 = vmatmul.bf16.gmra.mxu0 %v547
  %v629 = vpop.f32.mrf.mxu0
  %v630 = vadd.f32 0.0, %v629
  %v631 = vpop.f32.mrf.mxu0
  %v632 = vadd.f32 0.0, %v631
  %633 = vmatmul.bf16.gmra.mxu0 %v550
  %v634 = vpop.f32.mrf.mxu0
  %v635 = vadd.f32 0.0, %v634
  %v636 = vpop.f32.mrf.mxu0
  %v637 = vadd.f32 0.0, %v636
  %638 = vmatmul.bf16.gmra.mxu0 %v553
  %v639 = vpop.f32.mrf.mxu0
  %v640 = vadd.f32 0.0, %v639
  %v641 = vpop.f32.mrf.mxu0
  %v642 = vadd.f32 0.0, %v641
  %643 = vdwg.mxu0
  %v644 = vadd.f32 %v565, %v567
  %v645 = vadd.f32 %v644, %v570
  %v646 = vadd.f32 %v645, %v572
  %v647 = vadd.f32 %v646, %v575
  %v648 = vadd.f32 %v647, %v577
  %v649 = vadd.f32 %v648, %v580
  %v650 = vadd.f32 %v649, %v582
  %v651 = vadd.f32 %v650, %v585
  %v652 = vadd.f32 %v651, %v587
  %v653 = vadd.f32 %v652, %v590
  %v654 = vadd.f32 %v653, %v592
  %v655 = vadd.f32 %v654, %v595
  %v656 = vadd.f32 %v655, %v597
  %v657 = vadd.f32 %v656, %v600
  %v658 = vadd.f32 %v657, %v602
  %v659 = vadd.f32 %v658, %v605
  %v660 = vadd.f32 %v659, %v607
  %v661 = vadd.f32 %v660, %v610
  %v662 = vadd.f32 %v661, %v612
  %v663 = vadd.f32 %v662, %v615
  %v664 = vadd.f32 %v663, %v617
  %v665 = vadd.f32 %v664, %v620
  %v666 = vadd.f32 %v665, %v622
  %v667 = vadd.f32 %v666, %v625
  %v668 = vadd.f32 %v667, %v627
  %v669 = vadd.f32 %v668, %v630
  %v670 = vadd.f32 %v669, %v632
  %v671 = vadd.f32 %v670, %v635
  %v672 = vadd.f32 %v671, %v637
  %v673 = vadd.f32 %v672, %v640
  %v674 = vadd.f32 %v673, %v642
  %v675 = vrot.slane %v674, 4
  %v676 = vadd.f32 %v674, %v675
  %v677 = vrot.slane %v676, 2
  %v678 = vadd.f32 %v676, %v677
  %v679 = vrot.slane %v678, 1
  %v680 = vadd.f32 %v678, %v679
  %v681 = vadd.f32 %v323, %v680
  %v682 = vmul.f32 %v565, %v565
  %v683 = vmul.f32 %v567, %v567
  %v684 = vmul.f32 %v570, %v570
  %v685 = vmul.f32 %v572, %v572
  %v686 = vmul.f32 %v575, %v575
  %v687 = vmul.f32 %v577, %v577
  %v688 = vmul.f32 %v580, %v580
  %v689 = vmul.f32 %v582, %v582
  %v690 = vmul.f32 %v585, %v585
  %v691 = vmul.f32 %v587, %v587
  %v692 = vmul.f32 %v590, %v590
  %v693 = vmul.f32 %v592, %v592
  %v694 = vmul.f32 %v595, %v595
  %v695 = vmul.f32 %v597, %v597
  %v696 = vmul.f32 %v600, %v600
  %v697 = vmul.f32 %v602, %v602
  %v698 = vmul.f32 %v605, %v605
  %v699 = vmul.f32 %v607, %v607
  %v700 = vmul.f32 %v610, %v610
  %v701 = vmul.f32 %v612, %v612
  %v702 = vmul.f32 %v615, %v615
  %v703 = vmul.f32 %v617, %v617
  %v704 = vmul.f32 %v620, %v620
  %v705 = vmul.f32 %v622, %v622
  %v706 = vmul.f32 %v625, %v625
  %v707 = vmul.f32 %v627, %v627
  %v708 = vmul.f32 %v630, %v630
  %v709 = vmul.f32 %v632, %v632
  %v710 = vmul.f32 %v635, %v635
  %v711 = vmul.f32 %v637, %v637
  %v712 = vmul.f32 %v640, %v640
  %v713 = vmul.f32 %v642, %v642
  %v714 = vadd.f32 %v682, %v683
  %v715 = vadd.f32 %v714, %v684
  %v716 = vadd.f32 %v715, %v685
  %v717 = vadd.f32 %v716, %v686
  %v718 = vadd.f32 %v717, %v687
  %v719 = vadd.f32 %v718, %v688
  %v720 = vadd.f32 %v719, %v689
  %v721 = vadd.f32 %v720, %v690
  %v722 = vadd.f32 %v721, %v691
  %v723 = vadd.f32 %v722, %v692
  %v724 = vadd.f32 %v723, %v693
  %v725 = vadd.f32 %v724, %v694
  %v726 = vadd.f32 %v725, %v695
  %v727 = vadd.f32 %v726, %v696
  %v728 = vadd.f32 %v727, %v697
  %v729 = vadd.f32 %v728, %v698
  %v730 = vadd.f32 %v729, %v699
  %v731 = vadd.f32 %v730, %v700
  %v732 = vadd.f32 %v731, %v701
  %v733 = vadd.f32 %v732, %v702
  %v734 = vadd.f32 %v733, %v703
  %v735 = vadd.f32 %v734, %v704
  %v736 = vadd.f32 %v735, %v705
  %v737 = vadd.f32 %v736, %v706
  %v738 = vadd.f32 %v737, %v707
  %v739 = vadd.f32 %v738, %v708
  %v740 = vadd.f32 %v739, %v709
  %v741 = vadd.f32 %v740, %v710
  %v742 = vadd.f32 %v741, %v711
  %v743 = vadd.f32 %v742, %v712
  %v744 = vadd.f32 %v743, %v713
  %v745 = vrot.slane %v744, 4
  %v746 = vadd.f32 %v744, %v745
  %v747 = vrot.slane %v746, 2
  %v748 = vadd.f32 %v746, %v747
  %v749 = vrot.slane %v748, 1
  %v750 = vadd.f32 %v748, %v749
  %v751 = vadd.f32 %v393, %v750
  %752 = vst [vmem:[%s2] sm:$0x1] %v681
  %753 = vst [vmem:[%s2 + $0x1] sm:$0x1] %v751
  // Predicated region
  $region10: #{conv_block.2} parent=0 // pred_check
    _
  $region11: #{conv_block.2} parent=0 // pred_check_branch
    %755 = sbr.rel (0) target = $region13
  $region12: #{conv_block.2} parent=0 // pred_region
    _
  $region13: #{conv_block.2} parent=0 // pred_fallthru
    _
  // Predicated region
  $region14: #{conv_block.2} parent=0 // pred_check
    _
  $region15: #{conv_block.2} parent=0 // pred_check_branch
    %757 = sbr.rel (0) target = $region17
  $region16: #{conv_block.2} parent=0 // pred_region
    _
  $region17: #{conv_block.2} parent=0 // pred_fallthru
    _

// kernel: conv_block.3
$region0: #{conv_block.3}
  #allocation0 [shape = 'u32[]', space=smem, size = 0x4, offset = 0x4, fixed_abs, tag = 'smem constant byte address 0x4 - core index']
  #allocation1 [shape = 'u32[72,128]{1,0:T(1,128)}', space=vmem, size = 0x9000, scoped, tag = 'internal scratch']
  %s0 = inlined_call_operand.vmem [shape: bf16[512,36], index: 0, kind: input, shape index: {}]
  %s1 = inlined_call_operand.vmem [shape: bf16[36,128], index: 1, kind: input, shape index: {}]
  %s2 = inlined_call_operand.vmem [shape: f32[1,128], index: 2, kind: input, shape index: {}]
  %s3 = inlined_call_operand.vmem [shape: f32[1,128], index: 3, kind: input, shape index: {}]
  %s4 = inlined_call_operand.vmem [shape: f32[512,128], index: 4, kind: output, shape index: {}]
  %s5 = sld [smem:[#allocation0]]
  $region26: #{conv_block.3} parent=0
    _
  %s7 = ssub.s32 1, %s5
  %s8 = scalar_select 0, %s7, %s5
  // Predicated region
  $region2: #{conv_block.3} parent=0 // pred_check
    _
  $region3: #{conv_block.3} parent=0 // pred_check_branch
    %10 = sbr.rel (0) target = $region5
  $region4: #{conv_block.3} parent=0 // pred_region
    _
  $region5: #{conv_block.3} parent=0 // pred_fallthru
    _
  // Predicated region
  $region6: #{conv_block.3} parent=0 // pred_check
    _
  $region7: #{conv_block.3} parent=0 // pred_check_branch
    %12 = sbr.rel (0) target = $region9
  $region8: #{conv_block.3} parent=0 // pred_region
    _
  $region9: #{conv_block.3} parent=0 // pred_fallthru
    _
  // Predicated region
  $region10: #{conv_block.3} parent=0 // pred_check
    _
  $region11: #{conv_block.3} parent=0 // pred_check_branch
    %14 = sbr.rel (0) target = $region13
  $region12: #{conv_block.3} parent=0 // pred_region
    _
  $region13: #{conv_block.3} parent=0 // pred_fallthru
    _
  // Predicated region
  $region14: #{conv_block.3} parent=0 // pred_check
    _
  $region15: #{conv_block.3} parent=0 // pred_check_branch
    %16 = sbr.rel (0) target = $region17
  $region16: #{conv_block.3} parent=0 // pred_region
    _
  $region17: #{conv_block.3} parent=0 // pred_fallthru
    _
  %v18 = vld [vmem:[%s1] sm:$0xf]
  %v19 = vld [vmem:[%s1 + $0x4] sm:$0xf]
  %v20 = vld [vmem:[%s1 + $0x8] sm:$0xf]
  %v21 = vld [vmem:[%s1 + $0xc] sm:$0xf]
  %v22 = vld [vmem:[%s1 + $0x10] sm:$0x3]
  %v23 = vld [vmem:[%s2] sm:$0x1]
  %v24 = vld [vmem:[%s3] sm:$0x1]
  %v25 = vld [vmem:[%s0] sm:$0xf]
  %v26 = vld [vmem:[%s0 + $0x4] sm:$0xf]
  %v27 = vld [vmem:[%s0 + $0x8] sm:$0xf]
  %v28 = vld [vmem:[%s0 + $0xc] sm:$0xf]
  %v29 = vld [vmem:[%s0 + $0x10] sm:$0xf]
  %v30 = vld [vmem:[%s0 + $0x14] sm:$0xf]
  %v31 = vld [vmem:[%s0 + $0x18] sm:$0xf]
  %v32 = vld [vmem:[%s0 + $0x1c] sm:$0xf]
  %v33 = vld [vmem:[%s0 + $0x20] sm:$0xf]
  %v34 = vld [vmem:[%s0 + $0x24] sm:$0xf]
  %v35 = vld [vmem:[%s0 + $0x28] sm:$0xf]
  %v36 = vld [vmem:[%s0 + $0x2c] sm:$0xf]
  %v37 = vld [vmem:[%s0 + $0x30] sm:$0xf]
  %v38 = vld [vmem:[%s0 + $0x34] sm:$0xf]
  %v39 = vld [vmem:[%s0 + $0x38] sm:$0xf]
  %v40 = vld [vmem:[%s0 + $0x3c] sm:$0xf]
  %v41 = vld [vmem:[%s0 + $0x40] sm:$0xf]
  %v42 = vld [vmem:[%s0 + $0x44] sm:$0xf]
  %v43 = vld [vmem:[%s0 + $0x48] sm:$0xf]
  %v44 = vld [vmem:[%s0 + $0x4c] sm:$0xf]
  %v45 = vld [vmem:[%s0 + $0x50] sm:$0xf]
  %v46 = vld [vmem:[%s0 + $0x54] sm:$0xf]
  %v47 = vld [vmem:[%s0 + $0x58] sm:$0xf]
  %v48 = vld [vmem:[%s0 + $0x5c] sm:$0xf]
  %v49 = vld [vmem:[%s0 + $0x60] sm:$0xf]
  %v50 = vld [vmem:[%s0 + $0x64] sm:$0xf]
  %v51 = vld [vmem:[%s0 + $0x68] sm:$0xf]
  %v52 = vld [vmem:[%s0 + $0x6c] sm:$0xf]
  %v53 = vld [vmem:[%s0 + $0x70] sm:$0xf]
  %v54 = vld [vmem:[%s0 + $0x74] sm:$0xf]
  %v55 = vld [vmem:[%s0 + $0x78] sm:$0xf]
  %v56 = vld [vmem:[%s0 + $0x7c] sm:$0xf]
  %v89 = vunpack.c.l.b16 %v25
  %v90 = vunpack.c.l.b16 %v26
  %v91 = vunpack.c.l.b16 %v27
  %v92 = vunpack.c.l.b16 %v28
  %v93 = vunpack.c.l.b16 %v29
  %v94 = vunpack.c.l.b16 %v30
  %v95 = vunpack.c.l.b16 %v31
  %v96 = vunpack.c.l.b16 %v32
  %v97 = vunpack.c.l.b16 %v33
  %v98 = vunpack.c.l.b16 %v34
  %v99 = vunpack.c.l.b16 %v35
  %v100 = vunpack.c.l.b16 %v36
  %v101 = vunpack.c.l.b16 %v37
  %v102 = vunpack.c.l.b16 %v38
  %v103 = vunpack.c.l.b16 %v39
  %v104 = vunpack.c.l.b16 %v40
  %v105 = vunpack.c.l.b16 %v41
  %v106 = vunpack.c.l.b16 %v42
  %v107 = vunpack.c.l.b16 %v43
  %v108 = vunpack.c.l.b16 %v44
  %v109 = vunpack.c.l.b16 %v45
  %v110 = vunpack.c.l.b16 %v46
  %v111 = vunpack.c.l.b16 %v47
  %v112 = vunpack.c.l.b16 %v48
  %v113 = vunpack.c.l.b16 %v49
  %v114 = vunpack.c.l.b16 %v50
  %v115 = vunpack.c.l.b16 %v51
  %v116 = vunpack.c.l.b16 %v52
  %v117 = vunpack.c.l.b16 %v53
  %v118 = vunpack.c.l.b16 %v54
  %v119 = vunpack.c.l.b16 %v55
  %v120 = vunpack.c.l.b16 %v56
  %v121 = vpack.c.b16 %v90, %v89
  %v122 = vpack.c.b16 %v92, %v91
  %v123 = vpack.c.b16 %v94, %v93
  %v124 = vpack.c.b16 %v96, %v95
  %v125 = vpack.c.b16 %v98, %v97
  %v126 = vpack.c.b16 %v100, %v99
  %v127 = vpack.c.b16 %v102, %v101
  %v128 = vpack.c.b16 %v104, %v103
  %v129 = vpack.c.b16 %v106, %v105
  %v130 = vpack.c.b16 %v108, %v107
  %v131 = vpack.c.b16 %v110, %v109
  %v132 = vpack.c.b16 %v112, %v111
  %v133 = vpack.c.b16 %v114, %v113
  %v134 = vpack.c.b16 %v116, %v115
  %v135 = vpack.c.b16 %v118, %v117
  %v136 = vpack.c.b16 %v120, %v119
  %v142 = vunpack.c.l.b16 %v18
  %v143 = vunpack.c.l.b16 %v19
  %v144 = vunpack.c.l.b16 %v20
  %v145 = vunpack.c.l.b16 %v21
  %v146 = vunpack.c.l.b16 %v22
  %v147 = vpack.c.b16 %v143, %v142
  %v148 = vpack.c.b16 %v145, %v144
  %v149 = vpack.c.b16 %v146, %v146
  %vm152 = vcmask 293888
  %v154 = vsel %vm152, %v121, 0
  %v157 = vsel %vm152, %v122, 0
  %v160 = vsel %vm152, %v123, 0
  %v163 = vsel %vm152, %v124, 0
  %v166 = vsel %vm152, %v125, 0
  %v169 = vsel %vm152, %v126, 0
  %v172 = vsel %vm152, %v127, 0
  %v175 = vsel %vm152, %v128, 0
  %v178 = vsel %vm152, %v129, 0
  %v181 = vsel %vm152, %v130, 0
  %v184 = vsel %vm152, %v131, 0
  %v187 = vsel %vm152, %v132, 0
  %v190 = vsel %vm152, %v133, 0
  %v193 = vsel %vm152, %v134, 0
  %v196 = vsel %vm152, %v135, 0
  %v199 = vsel %vm152, %v136, 0
  %vm201 = vcmask 1041408
  %v203 = vsel %vm201, %v149, 0
  %205 = vmatpush.bf16.msra.mxu0 0
  %206 = vmatpush.bf16.msra.mxu0 0
  %207 = vmatpush.bf16.msra.mxu0 0
  %208 = vmatpush.bf16.msra.mxu0 0
  %209 = vmatpush.bf16.msra.mxu0 0
  %210 = vmatpush.bf16.msra.mxu0 %v203
  %211 = vmatpush.bf16.msra.mxu0 %v148
  %212 = vmatpush.bf16.msra.mxu0 %v147
  %213 = vmatmul.bf16.gmra.mxu0 %v154
  %v214 = vpop.f32.mrf.mxu0
  %v215 = vadd.f32 0.0, %v214
  %v216 = vpop.f32.mrf.mxu0
  %v217 = vadd.f32 0.0, %v216
  %218 = vmatmul.bf16.gmra.mxu0 %v157
  %v219 = vpop.f32.mrf.mxu0
  %v220 = vadd.f32 0.0, %v219
  %v221 = vpop.f32.mrf.mxu0
  %v222 = vadd.f32 0.0, %v221
  %223 = vmatmul.bf16.gmra.mxu0 %v160
  %v224 = vpop.f32.mrf.mxu0
  %v225 = vadd.f32 0.0, %v224
  %v226 = vpop.f32.mrf.mxu0
  %v227 = vadd.f32 0.0, %v226
  %228 = vmatmul.bf16.gmra.mxu0 %v163
  %v229 = vpop.f32.mrf.mxu0
  %v230 = vadd.f32 0.0, %v229
  %v231 = vpop.f32.mrf.mxu0
  %v232 = vadd.f32 0.0, %v231
  %233 = vmatmul.bf16.gmra.mxu0 %v166
  %v234 = vpop.f32.mrf.mxu0
  %v235 = vadd.f32 0.0, %v234
  %v236 = vpop.f32.mrf.mxu0
  %v237 = vadd.f32 0.0, %v236
  %238 = vmatmul.bf16.gmra.mxu0 %v169
  %v239 = vpop.f32.mrf.mxu0
  %v240 = vadd.f32 0.0, %v239
  %v241 = vpop.f32.mrf.mxu0
  %v242 = vadd.f32 0.0, %v241
  %243 = vmatmul.bf16.gmra.mxu0 %v172
  %v244 = vpop.f32.mrf.mxu0
  %v245 = vadd.f32 0.0, %v244
  %v246 = vpop.f32.mrf.mxu0
  %v247 = vadd.f32 0.0, %v246
  %248 = vmatmul.bf16.gmra.mxu0 %v175
  %v249 = vpop.f32.mrf.mxu0
  %v250 = vadd.f32 0.0, %v249
  %v251 = vpop.f32.mrf.mxu0
  %v252 = vadd.f32 0.0, %v251
  %253 = vmatmul.bf16.gmra.mxu0 %v178
  %v254 = vpop.f32.mrf.mxu0
  %v255 = vadd.f32 0.0, %v254
  %v256 = vpop.f32.mrf.mxu0
  %v257 = vadd.f32 0.0, %v256
  %258 = vmatmul.bf16.gmra.mxu0 %v181
  %v259 = vpop.f32.mrf.mxu0
  %v260 = vadd.f32 0.0, %v259
  %v261 = vpop.f32.mrf.mxu0
  %v262 = vadd.f32 0.0, %v261
  %263 = vmatmul.bf16.gmra.mxu0 %v184
  %v264 = vpop.f32.mrf.mxu0
  %v265 = vadd.f32 0.0, %v264
  %v266 = vpop.f32.mrf.mxu0
  %v267 = vadd.f32 0.0, %v266
  %268 = vmatmul.bf16.gmra.mxu0 %v187
  %v269 = vpop.f32.mrf.mxu0
  %v270 = vadd.f32 0.0, %v269
  %v271 = vpop.f32.mrf.mxu0
  %v272 = vadd.f32 0.0, %v271
  %273 = vmatmul.bf16.gmra.mxu0 %v190
  %v274 = vpop.f32.mrf.mxu0
  %v275 = vadd.f32 0.0, %v274
  %v276 = vpop.f32.mrf.mxu0
  %v277 = vadd.f32 0.0, %v276
  %278 = vmatmul.bf16.gmra.mxu0 %v193
  %v279 = vpop.f32.mrf.mxu0
  %v280 = vadd.f32 0.0, %v279
  %v281 = vpop.f32.mrf.mxu0
  %v282 = vadd.f32 0.0, %v281
  %283 = vmatmul.bf16.gmra.mxu0 %v196
  %v284 = vpop.f32.mrf.mxu0
  %v285 = vadd.f32 0.0, %v284
  %v286 = vpop.f32.mrf.mxu0
  %v287 = vadd.f32 0.0, %v286
  %288 = vmatmul.bf16.gmra.mxu0 %v199
  %v289 = vpop.f32.mrf.mxu0
  %v290 = vadd.f32 0.0, %v289
  %v291 = vpop.f32.mrf.mxu0
  %v292 = vadd.f32 0.0, %v291
  %293 = vdwg.mxu0
  %v295 = vperm.slane %v23, 0
  %v297 = vmul.f32 %v215, %v295
  %v298 = vmul.f32 %v217, %v295
  %v299 = vmul.f32 %v220, %v295
  %v300 = vmul.f32 %v222, %v295
  %v301 = vmul.f32 %v225, %v295
  %v302 = vmul.f32 %v227, %v295
  %v303 = vmul.f32 %v230, %v295
  %v304 = vmul.f32 %v232, %v295
  %v305 = vmul.f32 %v235, %v295
  %v306 = vmul.f32 %v237, %v295
  %v307 = vmul.f32 %v240, %v295
  %v308 = vmul.f32 %v242, %v295
  %v309 = vmul.f32 %v245, %v295
  %v310 = vmul.f32 %v247, %v295
  %v311 = vmul.f32 %v250, %v295
  %v312 = vmul.f32 %v252, %v295
  %v313 = vmul.f32 %v255, %v295
  %v314 = vmul.f32 %v257, %v295
  %v315 = vmul.f32 %v260, %v295
  %v316 = vmul.f32 %v262, %v295
  %v317 = vmul.f32 %v265, %v295
  %v318 = vmul.f32 %v267, %v295
  %v319 = vmul.f32 %v270, %v295
  %v320 = vmul.f32 %v272, %v295
  %v321 = vmul.f32 %v275, %v295
  %v322 = vmul.f32 %v277, %v295
  %v323 = vmul.f32 %v280, %v295
  %v324 = vmul.f32 %v282, %v295
  %v325 = vmul.f32 %v285, %v295
  %v326 = vmul.f32 %v287, %v295
  %v327 = vmul.f32 %v290, %v295
  %v328 = vmul.f32 %v292, %v295
  %v330 = vperm.slane %v24, 0
  %v332 = vadd.f32 %v297, %v330
  %v333 = vadd.f32 %v298, %v330
  %v334 = vadd.f32 %v299, %v330
  %v335 = vadd.f32 %v300, %v330
  %v336 = vadd.f32 %v301, %v330
  %v337 = vadd.f32 %v302, %v330
  %v338 = vadd.f32 %v303, %v330
  %v339 = vadd.f32 %v304, %v330
  %v340 = vadd.f32 %v305, %v330
  %v341 = vadd.f32 %v306, %v330
  %v342 = vadd.f32 %v307, %v330
  %v343 = vadd.f32 %v308, %v330
  %v344 = vadd.f32 %v309, %v330
  %v345 = vadd.f32 %v310, %v330
  %v346 = vadd.f32 %v311, %v330
  %v347 = vadd.f32 %v312, %v330
  %v348 = vadd.f32 %v313, %v330
  %v349 = vadd.f32 %v314, %v330
  %v350 = vadd.f32 %v315, %v330
  %v351 = vadd.f32 %v316, %v330
  %v352 = vadd.f32 %v317, %v330
  %v353 = vadd.f32 %v318, %v330
  %v354 = vadd.f32 %v319, %v330
  %v355 = vadd.f32 %v320, %v330
  %v356 = vadd.f32 %v321, %v330
  %v357 = vadd.f32 %v322, %v330
  %v358 = vadd.f32 %v323, %v330
  %v359 = vadd.f32 %v324, %v330
  %v360 = vadd.f32 %v325, %v330
  %v361 = vadd.f32 %v326, %v330
  %v362 = vadd.f32 %v327, %v330
  %v363 = vadd.f32 %v328, %v330
  %v364 = vmax.f32 %v332, 0.0
  %v365 = vmax.f32 %v333, 0.0
  %v366 = vmax.f32 %v334, 0.0
  %v367 = vmax.f32 %v335, 0.0
  %v368 = vmax.f32 %v336, 0.0
  %v369 = vmax.f32 %v337, 0.0
  %v370 = vmax.f32 %v338, 0.0
  %v371 = vmax.f32 %v339, 0.0
  %v372 = vmax.f32 %v340, 0.0
  %v373 = vmax.f32 %v341, 0.0
  %v374 = vmax.f32 %v342, 0.0
  %v375 = vmax.f32 %v343, 0.0
  %v376 = vmax.f32 %v344, 0.0
  %v377 = vmax.f32 %v345, 0.0
  %v378 = vmax.f32 %v346, 0.0
  %v379 = vmax.f32 %v347, 0.0
  %v380 = vmax.f32 %v348, 0.0
  %v381 = vmax.f32 %v349, 0.0
  %v382 = vmax.f32 %v350, 0.0
  %v383 = vmax.f32 %v351, 0.0
  %v384 = vmax.f32 %v352, 0.0
  %v385 = vmax.f32 %v353, 0.0
  %v386 = vmax.f32 %v354, 0.0
  %v387 = vmax.f32 %v355, 0.0
  %v388 = vmax.f32 %v356, 0.0
  %v389 = vmax.f32 %v357, 0.0
  %v390 = vmax.f32 %v358, 0.0
  %v391 = vmax.f32 %v359, 0.0
  %v392 = vmax.f32 %v360, 0.0
  %v393 = vmax.f32 %v361, 0.0
  %v394 = vmax.f32 %v362, 0.0
  %v395 = vmax.f32 %v363, 0.0
  %396 = vst [vmem:[%s4] sm:$0xff] %v364
  %397 = vst [vmem:[%s4 + $0x8] sm:$0xff] %v365
  %398 = vst [vmem:[%s4 + $0x10] sm:$0xff] %v366
  %399 = vst [vmem:[%s4 + $0x18] sm:$0xff] %v367
  %400 = vst [vmem:[%s4 + $0x20] sm:$0xff] %v368
  %401 = vst [vmem:[%s4 + $0x28] sm:$0xff] %v369
  %402 = vst [vmem:[%s4 + $0x30] sm:$0xff] %v370
  %403 = vst [vmem:[%s4 + $0x38] sm:$0xff] %v371
  %404 = vst [vmem:[%s4 + $0x40] sm:$0xff] %v372
  %405 = vst [vmem:[%s4 + $0x48] sm:$0xff] %v373
  %406 = vst [vmem:[%s4 + $0x50] sm:$0xff] %v374
  %407 = vst [vmem:[%s4 + $0x58] sm:$0xff] %v375
  %408 = vst [vmem:[%s4 + $0x60] sm:$0xff] %v376
  %409 = vst [vmem:[%s4 + $0x68] sm:$0xff] %v377
  %410 = vst [vmem:[%s4 + $0x70] sm:$0xff] %v378
  %411 = vst [vmem:[%s4 + $0x78] sm:$0xff] %v379
  %412 = vst [vmem:[%s4 + $0x80] sm:$0xff] %v380
  %413 = vst [vmem:[%s4 + $0x88] sm:$0xff] %v381
  %414 = vst [vmem:[%s4 + $0x90] sm:$0xff] %v382
  %415 = vst [vmem:[%s4 + $0x98] sm:$0xff] %v383
  %416 = vst [vmem:[%s4 + $0xa0] sm:$0xff] %v384
  %417 = vst [vmem:[%s4 + $0xa8] sm:$0xff] %v385
  %418 = vst [vmem:[%s4 + $0xb0] sm:$0xff] %v386
  %419 = vst [vmem:[%s4 + $0xb8] sm:$0xff] %v387
  %420 = vst [vmem:[%s4 + $0xc0] sm:$0xff] %v388
  %421 = vst [vmem:[%s4 + $0xc8] sm:$0xff] %v389
  %422 = vst [vmem:[%s4 + $0xd0] sm:$0xff] %v390
  %423 = vst [vmem:[%s4 + $0xd8] sm:$0xff] %v391
  %424 = vst [vmem:[%s4 + $0xe0] sm:$0xff] %v392
  %425 = vst [vmem:[%s4 + $0xe8] sm:$0xff] %v393
  %426 = vst [vmem:[%s4 + $0xf0] sm:$0xff] %v394
  %427 = vst [vmem:[%s4 + $0xf8] sm:$0xff] %v395
  %s428 = scalar_lea.vmem %s0, 128
  %v429 = vld [vmem:[%s428] sm:$0xf]
  %v430 = vld [vmem:[%s428 + $0x4] sm:$0xf]
  %v431 = vld [vmem:[%s428 + $0x8] sm:$0xf]
  %v432 = vld [vmem:[%s428 + $0xc] sm:$0xf]
  %v433 = vld [vmem:[%s428 + $0x10] sm:$0xf]
  %v434 = vld [vmem:[%s428 + $0x14] sm:$0xf]
  %v435 = vld [vmem:[%s428 + $0x18] sm:$0xf]
  %v436 = vld [vmem:[%s428 + $0x1c] sm:$0xf]
  %v437 = vld [vmem:[%s428 + $0x20] sm:$0xf]
  %v438 = vld [vmem:[%s428 + $0x24] sm:$0xf]
  %v439 = vld [vmem:[%s428 + $0x28] sm:$0xf]
  %v440 = vld [vmem:[%s428 + $0x2c] sm:$0xf]
  %v441 = vld [vmem:[%s428 + $0x30] sm:$0xf]
  %v442 = vld [vmem:[%s428 + $0x34] sm:$0xf]
  %v443 = vld [vmem:[%s428 + $0x38] sm:$0xf]
  %v444 = vld [vmem:[%s428 + $0x3c] sm:$0xf]
  %v445 = vld [vmem:[%s428 + $0x40] sm:$0xf]
  %v446 = vld [vmem:[%s428 + $0x44] sm:$0xf]
  %v447 = vld [vmem:[%s428 + $0x48] sm:$0xf]
  %v448 = vld [vmem:[%s428 + $0x4c] sm:$0xf]
  %v449 = vld [vmem:[%s428 + $0x50] sm:$0xf]
  %v450 = vld [vmem:[%s428 + $0x54] sm:$0xf]
  %v451 = vld [vmem:[%s428 + $0x58] sm:$0xf]
  %v452 = vld [vmem:[%s428 + $0x5c] sm:$0xf]
  %v453 = vld [vmem:[%s428 + $0x60] sm:$0xf]
  %v454 = vld [vmem:[%s428 + $0x64] sm:$0xf]
  %v455 = vld [vmem:[%s428 + $0x68] sm:$0xf]
  %v456 = vld [vmem:[%s428 + $0x6c] sm:$0xf]
  %v457 = vld [vmem:[%s428 + $0x70] sm:$0xf]
  %v458 = vld [vmem:[%s428 + $0x74] sm:$0xf]
  %v459 = vld [vmem:[%s428 + $0x78] sm:$0xf]
  %v460 = vld [vmem:[%s428 + $0x7c] sm:$0xf]
  %v493 = vunpack.c.l.b16 %v429
  %v494 = vunpack.c.l.b16 %v430
  %v495 = vunpack.c.l.b16 %v431
  %v496 = vunpack.c.l.b16 %v432
  %v497 = vunpack.c.l.b16 %v433
  %v498 = vunpack.c.l.b16 %v434
  %v499 = vunpack.c.l.b16 %v435
  %v500 = vunpack.c.l.b16 %v436
  %v501 = vunpack.c.l.b16 %v437
  %v502 = vunpack.c.l.b16 %v438
  %v503 = vunpack.c.l.b16 %v439
  %v504 = vunpack.c.l.b16 %v440
  %v505 = vunpack.c.l.b16 %v441
  %v506 = vunpack.c.l.b16 %v442
  %v507 = vunpack.c.l.b16 %v443
  %v508 = vunpack.c.l.b16 %v444
  %v509 = vunpack.c.l.b16 %v445
  %v510 = vunpack.c.l.b16 %v446
  %v511 = vunpack.c.l.b16 %v447
  %v512 = vunpack.c.l.b16 %v448
  %v513 = vunpack.c.l.b16 %v449
  %v514 = vunpack.c.l.b16 %v450
  %v515 = vunpack.c.l.b16 %v451
  %v516 = vunpack.c.l.b16 %v452
  %v517 = vunpack.c.l.b16 %v453
  %v518 = vunpack.c.l.b16 %v454
  %v519 = vunpack.c.l.b16 %v455
  %v520 = vunpack.c.l.b16 %v456
  %v521 = vunpack.c.l.b16 %v457
  %v522 = vunpack.c.l.b16 %v458
  %v523 = vunpack.c.l.b16 %v459
  %v524 = vunpack.c.l.b16 %v460
  %v525 = vpack.c.b16 %v494, %v493
  %v526 = vpack.c.b16 %v496, %v495
  %v527 = vpack.c.b16 %v498, %v497
  %v528 = vpack.c.b16 %v500, %v499
  %v529 = vpack.c.b16 %v502, %v501
  %v530 = vpack.c.b16 %v504, %v503
  %v531 = vpack.c.b16 %v506, %v505
  %v532 = vpack.c.b16 %v508, %v507
  %v533 = vpack.c.b16 %v510, %v509
  %v534 = vpack.c.b16 %v512, %v511
  %v535 = vpack.c.b16 %v514, %v513
  %v536 = vpack.c.b16 %v516, %v515
  %v537 = vpack.c.b16 %v518, %v517
  %v538 = vpack.c.b16 %v520, %v519
  %v539 = vpack.c.b16 %v522, %v521
  %v540 = vpack.c.b16 %v524, %v523
  %v542 = vsel %vm152, %v525, 0
  %v545 = vsel %vm152, %v526, 0
  %v548 = vsel %vm152, %v527, 0
  %v551 = vsel %vm152, %v528, 0
  %v554 = vsel %vm152, %v529, 0
  %v557 = vsel %vm152, %v530, 0
  %v560 = vsel %vm152, %v531, 0
  %v563 = vsel %vm152, %v532, 0
  %v566 = vsel %vm152, %v533, 0
  %v569 = vsel %vm152, %v534, 0
  %v572 = vsel %vm152, %v535, 0
  %v575 = vsel %vm152, %v536, 0
  %v578 = vsel %vm152, %v537, 0
  %v581 = vsel %vm152, %v538, 0
  %v584 = vsel %vm152, %v539, 0
  %v587 = vsel %vm152, %v540, 0
  %589 = vmatpush.bf16.msra.mxu0 0
  %590 = vmatpush.bf16.msra.mxu0 0
  %591 = vmatpush.bf16.msra.mxu0 0
  %592 = vmatpush.bf16.msra.mxu0 0
  %593 = vmatpush.bf16.msra.mxu0 0
  %594 = vmatpush.bf16.msra.mxu0 %v203
  %595 = vmatpush.bf16.msra.mxu0 %v148
  %596 = vmatpush.bf16.msra.mxu0 %v147
  %597 = vmatmul.bf16.gmra.mxu0 %v542
  %v598 = vpop.f32.mrf.mxu0
  %v599 = vadd.f32 0.0, %v598
  %v600 = vpop.f32.mrf.mxu0
  %v601 = vadd.f32 0.0, %v600
  %602 = vmatmul.bf16.gmra.mxu0 %v545
  %v603 = vpop.f32.mrf.mxu0
  %v604 = vadd.f32 0.0, %v603
  %v605 = vpop.f32.mrf.mxu0
  %v606 = vadd.f32 0.0, %v605
  %607 = vmatmul.bf16.gmra.mxu0 %v548
  %v608 = vpop.f32.mrf.mxu0
  %v609 = vadd.f32 0.0, %v608
  %v610 = vpop.f32.mrf.mxu0
  %v611 = vadd.f32 0.0, %v610
  %612 = vmatmul.bf16.gmra.mxu0 %v551
  %v613 = vpop.f32.mrf.mxu0
  %v614 = vadd.f32 0.0, %v613
  %v615 = vpop.f32.mrf.mxu0
  %v616 = vadd.f32 0.0, %v615
  %617 = vmatmul.bf16.gmra.mxu0 %v554
  %v618 = vpop.f32.mrf.mxu0
  %v619 = vadd.f32 0.0, %v618
  %v620 = vpop.f32.mrf.mxu0
  %v621 = vadd.f32 0.0, %v620
  %622 = vmatmul.bf16.gmra.mxu0 %v557
  %v623 = vpop.f32.mrf.mxu0
  %v624 = vadd.f32 0.0, %v623
  %v625 = vpop.f32.mrf.mxu0
  %v626 = vadd.f32 0.0, %v625
  %627 = vmatmul.bf16.gmra.mxu0 %v560
  %v628 = vpop.f32.mrf.mxu0
  %v629 = vadd.f32 0.0, %v628
  %v630 = vpop.f32.mrf.mxu0
  %v631 = vadd.f32 0.0, %v630
  %632 = vmatmul.bf16.gmra.mxu0 %v563
  %v633 = vpop.f32.mrf.mxu0
  %v634 = vadd.f32 0.0, %v633
  %v635 = vpop.f32.mrf.mxu0
  %v636 = vadd.f32 0.0, %v635
  %637 = vmatmul.bf16.gmra.mxu0 %v566
  %v638 = vpop.f32.mrf.mxu0
  %v639 = vadd.f32 0.0, %v638
  %v640 = vpop.f32.mrf.mxu0
  %v641 = vadd.f32 0.0, %v640
  %642 = vmatmul.bf16.gmra.mxu0 %v569
  %v643 = vpop.f32.mrf.mxu0
  %v644 = vadd.f32 0.0, %v643
  %v645 = vpop.f32.mrf.mxu0
  %v646 = vadd.f32 0.0, %v645
  %647 = vmatmul.bf16.gmra.mxu0 %v572
  %v648 = vpop.f32.mrf.mxu0
  %v649 = vadd.f32 0.0, %v648
  %v650 = vpop.f32.mrf.mxu0
  %v651 = vadd.f32 0.0, %v650
  %652 = vmatmul.bf16.gmra.mxu0 %v575
  %v653 = vpop.f32.mrf.mxu0
  %v654 = vadd.f32 0.0, %v653
  %v655 = vpop.f32.mrf.mxu0
  %v656 = vadd.f32 0.0, %v655
  %657 = vmatmul.bf16.gmra.mxu0 %v578
  %v658 = vpop.f32.mrf.mxu0
  %v659 = vadd.f32 0.0, %v658
  %v660 = vpop.f32.mrf.mxu0
  %v661 = vadd.f32 0.0, %v660
  %662 = vmatmul.bf16.gmra.mxu0 %v581
  %v663 = vpop.f32.mrf.mxu0
  %v664 = vadd.f32 0.0, %v663
  %v665 = vpop.f32.mrf.mxu0
  %v666 = vadd.f32 0.0, %v665
  %667 = vmatmul.bf16.gmra.mxu0 %v584
  %v668 = vpop.f32.mrf.mxu0
  %v669 = vadd.f32 0.0, %v668
  %v670 = vpop.f32.mrf.mxu0
  %v671 = vadd.f32 0.0, %v670
  %672 = vmatmul.bf16.gmra.mxu0 %v587
  %v673 = vpop.f32.mrf.mxu0
  %v674 = vadd.f32 0.0, %v673
  %v675 = vpop.f32.mrf.mxu0
  %v676 = vadd.f32 0.0, %v675
  %677 = vdwg.mxu0
  %v678 = vmul.f32 %v599, %v295
  %v679 = vmul.f32 %v601, %v295
  %v680 = vmul.f32 %v604, %v295
  %v681 = vmul.f32 %v606, %v295
  %v682 = vmul.f32 %v609, %v295
  %v683 = vmul.f32 %v611, %v295
  %v684 = vmul.f32 %v614, %v295
  %v685 = vmul.f32 %v616, %v295
  %v686 = vmul.f32 %v619, %v295
  %v687 = vmul.f32 %v621, %v295
  %v688 = vmul.f32 %v624, %v295
  %v689 = vmul.f32 %v626, %v295
  %v690 = vmul.f32 %v629, %v295
  %v691 = vmul.f32 %v631, %v295
  %v692 = vmul.f32 %v634, %v295
  %v693 = vmul.f32 %v636, %v295
  %v694 = vmul.f32 %v639, %v295
  %v695 = vmul.f32 %v641, %v295
  %v696 = vmul.f32 %v644, %v295
  %v697 = vmul.f32 %v646, %v295
  %v698 = vmul.f32 %v649, %v295
  %v699 = vmul.f32 %v651, %v295
  %v700 = vmul.f32 %v654, %v295
  %v701 = vmul.f32 %v656, %v295
  %v702 = vmul.f32 %v659, %v295
  %v703 = vmul.f32 %v661, %v295
  %v704 = vmul.f32 %v664, %v295
  %v705 = vmul.f32 %v666, %v295
  %v706 = vmul.f32 %v669, %v295
  %v707 = vmul.f32 %v671, %v295
  %v708 = vmul.f32 %v674, %v295
  %v709 = vmul.f32 %v676, %v295
  %v710 = vadd.f32 %v678, %v330
  %v711 = vadd.f32 %v679, %v330
  %v712 = vadd.f32 %v680, %v330
  %v713 = vadd.f32 %v681, %v330
  %v714 = vadd.f32 %v682, %v330
  %v715 = vadd.f32 %v683, %v330
  %v716 = vadd.f32 %v684, %v330
  %v717 = vadd.f32 %v685, %v330
  %v718 = vadd.f32 %v686, %v330
  %v719 = vadd.f32 %v687, %v330
  %v720 = vadd.f32 %v688, %v330
  %v721 = vadd.f32 %v689, %v330
  %v722 = vadd.f32 %v690, %v330
  %v723 = vadd.f32 %v691, %v330
  %v724 = vadd.f32 %v692, %v330
  %v725 = vadd.f32 %v693, %v330
  %v726 = vadd.f32 %v694, %v330
  %v727 = vadd.f32 %v695, %v330
  %v728 = vadd.f32 %v696, %v330
  %v729 = vadd.f32 %v697, %v330
  %v730 = vadd.f32 %v698, %v330
  %v731 = vadd.f32 %v699, %v330
  %v732 = vadd.f32 %v700, %v330
  %v733 = vadd.f32 %v701, %v330
  %v734 = vadd.f32 %v702, %v330
  %v735 = vadd.f32 %v703, %v330
  %v736 = vadd.f32 %v704, %v330
  %v737 = vadd.f32 %v705, %v330
  %v738 = vadd.f32 %v706, %v330
  %v739 = vadd.f32 %v707, %v330
  %v740 = vadd.f32 %v708, %v330
  %v741 = vadd.f32 %v709, %v330
  %v742 = vmax.f32 %v710, 0.0
  %v743 = vmax.f32 %v711, 0.0
  %v744 = vmax.f32 %v712, 0.0
  %v745 = vmax.f32 %v713, 0.0
  %v746 = vmax.f32 %v714, 0.0
  %v747 = vmax.f32 %v715, 0.0
  %v748 = vmax.f32 %v716, 0.0
  %v749 = vmax.f32 %v717, 0.0
  %v750 = vmax.f32 %v718, 0.0
  %v751 = vmax.f32 %v719, 0.0
  %v752 = vmax.f32 %v720, 0.0
  %v753 = vmax.f32 %v721, 0.0
  %v754 = vmax.f32 %v722, 0.0
  %v755 = vmax.f32 %v723, 0.0
  %v756 = vmax.f32 %v724, 0.0
  %v757 = vmax.f32 %v725, 0.0
  %v758 = vmax.f32 %v726, 0.0
  %v759 = vmax.f32 %v727, 0.0
  %v760 = vmax.f32 %v728, 0.0
  %v761 = vmax.f32 %v729, 0.0
  %v762 = vmax.f32 %v730, 0.0
  %v763 = vmax.f32 %v731, 0.0
  %v764 = vmax.f32 %v732, 0.0
  %v765 = vmax.f32 %v733, 0.0
  %v766 = vmax.f32 %v734, 0.0
  %v767 = vmax.f32 %v735, 0.0
  %v768 = vmax.f32 %v736, 0.0
  %v769 = vmax.f32 %v737, 0.0
  %v770 = vmax.f32 %v738, 0.0
  %v771 = vmax.f32 %v739, 0.0
  %v772 = vmax.f32 %v740, 0.0
  %v773 = vmax.f32 %v741, 0.0
  %s774 = scalar_lea.vmem %s4, 256
  %775 = vst [vmem:[%s774] sm:$0xff] %v742
  %776 = vst [vmem:[%s774 + $0x8] sm:$0xff] %v743
  %777 = vst [vmem:[%s774 + $0x10] sm:$0xff] %v744
  %778 = vst [vmem:[%s774 + $0x18] sm:$0xff] %v745
  %779 = vst [vmem:[%s774 + $0x20] sm:$0xff] %v746
  %780 = vst [vmem:[%s774 + $0x28] sm:$0xff] %v747
  %781 = vst [vmem:[%s774 + $0x30] sm:$0xff] %v748
  %782 = vst [vmem:[%s774 + $0x38] sm:$0xff] %v749
  %783 = vst [vmem:[%s774 + $0x40] sm:$0xff] %v750
  %784 = vst [vmem:[%s774 + $0x48] sm:$0xff] %v751
  %785 = vst [vmem:[%s774 + $0x50] sm:$0xff] %v752
  %786 = vst [vmem:[%s774 + $0x58] sm:$0xff] %v753
  %787 = vst [vmem:[%s774 + $0x60] sm:$0xff] %v754
  %788 = vst [vmem:[%s774 + $0x68] sm:$0xff] %v755
  %789 = vst [vmem:[%s774 + $0x70] sm:$0xff] %v756
  %790 = vst [vmem:[%s774 + $0x78] sm:$0xff] %v757
  %791 = vst [vmem:[%s774 + $0x80] sm:$0xff] %v758
  %792 = vst [vmem:[%s774 + $0x88] sm:$0xff] %v759
  %793 = vst [vmem:[%s774 + $0x90] sm:$0xff] %v760
  %794 = vst [vmem:[%s774 + $0x98] sm:$0xff] %v761
  %795 = vst [vmem:[%s774 + $0xa0] sm:$0xff] %v762
  %796 = vst [vmem:[%s774 + $0xa8] sm:$0xff] %v763
  %797 = vst [vmem:[%s774 + $0xb0] sm:$0xff] %v764
  %798 = vst [vmem:[%s774 + $0xb8] sm:$0xff] %v765
  %799 = vst [vmem:[%s774 + $0xc0] sm:$0xff] %v766
  %800 = vst [vmem:[%s774 + $0xc8] sm:$0xff] %v767
  %801 = vst [vmem:[%s774 + $0xd0] sm:$0xff] %v768
  %802 = vst [vmem:[%s774 + $0xd8] sm:$0xff] %v769
  %803 = vst [vmem:[%s774 + $0xe0] sm:$0xff] %v770
  %804 = vst [vmem:[%s774 + $0xe8] sm:$0xff] %v771
  %805 = vst [vmem:[%s774 + $0xf0] sm:$0xff] %v772
  %806 = vst [vmem:[%s774 + $0xf8] sm:$0xff] %v773
  // Predicated region
  $region18: #{conv_block.3} parent=0 // pred_check
    _
  $region19: #{conv_block.3} parent=0 // pred_check_branch
    %808 = sbr.rel (0) target = $region21
  $region20: #{conv_block.3} parent=0 // pred_region
    _
  $region21: #{conv_block.3} parent=0 // pred_fallthru
    _
  // Predicated region
  $region22: #{conv_block.3} parent=0 // pred_check
    _
  $region23: #{conv_block.3} parent=0 // pred_check_branch
    %810 = sbr.rel (0) target = $region25
  $region24: #{conv_block.3} parent=0 // pred_region
    _
  $region25: #{conv_block.3} parent=0 // pred_fallthru
    _

</llo_original>
